<compile_context>
chip_gen: v7x
topology: tpu7x:2x2x1
jax: 0.10.0
libtpu: 0.0.40
codegen_flags: <defaults>
</compile_context>

<pallas_src>
from functools import partial

import jax
import jax.numpy as jnp
from jax import lax
from jax.experimental import pallas as pl
from jax.experimental.pallas import tpu as pltpu


def _round_up(n, m):
    return (n + m - 1) // m * m


def _vmem_limit_bytes(est_bytes):
    """Generation-aware VMEM limit: ~15% headroom below physical capacity."""
    cap = 128 * 1024 * 1024
    try:
        info = pltpu.get_tpu_info()
        cap = int(getattr(info, "vmem_capacity_bytes", cap) or cap)
    except Exception:
        pass
    want = max(int(1.5 * est_bytes), 16 * 1024 * 1024)
    return int(min(want, int(0.85 * cap)))


# --------------------------------------------------------------------------- #
# Kernels
# --------------------------------------------------------------------------- #
def _qkv_proj_kernel(x_ref, w_ref, b_ref, qkv_ref):
    # x_ref: (1, tr, Cp) f32 | w_ref: (Cp, 3D) bf16 | b_ref: (1, 3D) f32
    # qkv_ref: (1, tr, 3D) bf16   (softmax scale already folded into the q columns)
    x = x_ref[0].astype(jnp.bfloat16)
    acc = jnp.dot(x, w_ref[...], preferred_element_type=jnp.float32)
    qkv_ref[0] = (acc + b_ref[...]).astype(jnp.bfloat16)


def _attention_kernel(q_ref, k_ref, v_ref, o_ref, *, hw):
    # q_ref: (1,1,tq,hd) bf16 | k_ref/v_ref: (1,1,HWp,hd) bf16 | o_ref: (1,1,tq,hd) bf16
    q = q_ref[0, 0]
    k = k_ref[0, 0]
    v = v_ref[0, 0]
    # scores: contract head_dim (no materialized transpose of k).
    s = lax.dot_general(q, k, (((1,), (1,)), ((), ())),
                        preferred_element_type=jnp.float32)          # (tq, HWp) f32
    hw_pad = k.shape[0]
    if hw_pad > hw:                                                   # static check
        kid = lax.broadcasted_iota(jnp.int32, s.shape, 1)
        s = jnp.where(kid < hw, s, -1e30)                             # mask padded keys
    s = s - jnp.max(s, axis=-1, keepdims=True)
    e = jnp.exp(s)
    # approx reciprocal -> rows sum to 1 +/- ~2^-12; within stated tolerance.
    p = e * pl.reciprocal(jnp.sum(e, axis=-1, keepdims=True), approx=True)
    o_ref[0, 0] = jnp.dot(p.astype(v.dtype), v,
                          preferred_element_type=jnp.float32).astype(o_ref.dtype)


def _proj_norm_kernel(o_ref, x_ref, wp_ref, bp_ref, gamma_ref, beta_ref,
                      red_ref, bcast_ref, out_ref, *, hw, tr, eps):
    # o_ref: (1,HWp,D) bf16 | x_ref/out_ref: (1,HWp,Cp) f32 | wp_ref: (D,Cp) bf16
    # red_ref: (Cp,G) f32 (group reduce / (HW*cg)) | bcast_ref: (G,Cp) f32
    hw_pad, cp = x_ref.shape[1], x_ref.shape[2]
    n_rt = hw_pad // tr

    def row_tile(t, carry):
        rsum, rsq = carry
        r0 = pl.multiple_of(t * tr, tr)
        o_t = o_ref[0, pl.ds(r0, tr), :]                              # (tr, D) bf16
        x_t = x_ref[0, pl.ds(r0, tr), :]                              # (tr, Cp) f32
        y = jnp.dot(o_t, wp_ref[...],
                    preferred_element_type=jnp.float32) + bp_ref[...]
        r = x_t + y                                                   # residual, f32
        out_ref[0, pl.ds(r0, tr), :] = r            # staged; normalized in place below
        if hw_pad > hw:                                               # static check
            valid = (r0 + lax.broadcasted_iota(jnp.int32, (tr, 1), 0)) < hw
            r = jnp.where(valid, r, 0.0)            # padded rows excluded from stats
        return (rsum + jnp.sum(r, axis=0, keepdims=True),
                rsq + jnp.sum(r * r, axis=0, keepdims=True))

    zeros = jnp.zeros((1, cp), jnp.float32)
    rsum, rsq = lax.fori_loop(0, n_rt, row_tile, (zeros, zeros))

    # GroupNorm: channel sums -> group mean / E[x^2] (tiny matmuls) -> per channel.
    mu = jnp.dot(jnp.dot(rsum, red_ref[...], preferred_element_type=jnp.float32),
                 bcast_ref[...], preferred_element_type=jnp.float32)  # (1, Cp)
    ex2 = jnp.dot(jnp.dot(rsq, red_ref[...], preferred_element_type=jnp.float32),
                  bcast_ref[...], preferred_element_type=jnp.float32)
    # One-pass variance (E[x^2]-E[x]^2) in f32: fine at the 2e-2 tolerance.
    inv = lax.rsqrt(ex2 - mu * mu + eps)
    ga = gamma_ref[...] * inv
    be = beta_ref[...] - mu * ga
    out_ref[0] = out_ref[0] * ga + be


# --------------------------------------------------------------------------- #
# Wrapper
# --------------------------------------------------------------------------- #
def _forward(x_nchw, params, num_heads, head_dim, groups, eps, single_buffer):
    B, C, H, W = x_nchw.shape
    assert C % groups == 0, "in_channels must be divisible by groups"
    HW = H * W
    D = num_heads * head_dim
    D3 = 3 * D
    scale = head_dim ** (-0.5)

    Cp = _round_up(C, 128)                      # lane-dense channels
    HWp = _round_up(HW, 128)
    tq = 256 if HWp % 256 == 0 else 128         # review #7: never below 128
    HWp = _round_up(HWp, tq)
    n_rt = HWp // tq

    # -------- host-side parameter packing (no per-head padding: review #1) -----
    w_qkv = jnp.concatenate([params["wq"] * scale, params["wk"], params["wv"]], axis=1)
    w_qkv = jnp.pad(w_qkv, ((0, Cp - C), (0, 0))).astype(jnp.bfloat16)      # (Cp, 3D)
    b_qkv = jnp.concatenate([params["bq"] * scale, params["bk"], params["bv"]],
                            axis=1).astype(jnp.float32)                      # (1, 3D)

    wp = jnp.pad(params["wp"], ((0, 0), (0, Cp - C))).astype(jnp.bfloat16)   # (D, Cp)
    bp = jnp.pad(params["bp"], ((0, 0), (0, Cp - C))).astype(jnp.float32)
    gamma = jnp.pad(params["gamma"], ((0, 0), (0, Cp - C))).astype(jnp.float32)
    beta = jnp.pad(params["beta"], ((0, 0), (0, Cp - C))).astype(jnp.float32)

    # GroupNorm reduce / broadcast matrices (review #8: no dense (Cp,Cp) matrix).
    cg = C // groups
    ch = jnp.arange(Cp)
    onehot = ((ch[:, None] // cg) == jnp.arange(groups)[None, :]) & (ch[:, None] < C)
    red = onehot.astype(jnp.float32) / float(HW * cg)                        # (Cp, G)
    bcast = onehot.astype(jnp.float32).T                                     # (G, Cp)

    # Input: NCHW -> (B, HWp, Cp) f32 (residual + GroupNorm stay in f32).
    x_flat = jnp.transpose(x_nchw, (0, 2, 3, 1)).reshape(B, HW, C)
    x_flat = jnp.pad(x_flat, ((0, 0), (0, HWp - HW), (0, Cp - C))).astype(jnp.float32)

    def const_spec(shape):
        # Weights whose block never changes across the grid: single-buffer them
        # (review #3).  Fallback path builds a plain BlockSpec.
        idx = lambda *_: (0,) * len(shape)
        if single_buffer:
            return pl.BlockSpec(shape, idx, pipeline_mode=pl.Buffered(1))
        return pl.BlockSpec(shape, idx)

    f32, bf16 = 4, 2

    # -------- pass 1: fused qkv projection, grid (B, row tiles) ----------------
    est = (2 * tq * Cp * f32 + Cp * D3 * bf16 + D3 * f32
           + 2 * tq * D3 * bf16 + tq * D3 * f32 + tq * Cp * bf16)
    qkv = pl.pallas_call(
        _qkv_proj_kernel,
        out_shape=jax.ShapeDtypeStruct((B, HWp, D3), jnp.bfloat16),
        grid=(B, n_rt),
        in_specs=[pl.BlockSpec((1, tq, Cp), lambda b, t: (b, t, 0)),
                  const_spec((Cp, D3)),
                  const_spec((1, D3))],
        out_specs=pl.BlockSpec((1, tq, D3), lambda b, t: (b, t, 0)),
        compiler_params=pltpu.CompilerParams(
            dimension_semantics=("parallel", "parallel"),
            vmem_limit_bytes=_vmem_limit_bytes(est)),
    )(x_flat, w_qkv, b_qkv)

    # Head split: cheap memory-bound XLA transposes of the bf16 qkv tensor.
    qkv = qkv.reshape(B, HWp, 3, num_heads, head_dim)
    q = jnp.transpose(qkv[:, :, 0], (0, 2, 1, 3))        # (B, nh, HWp, hd) bf16
    k = jnp.transpose(qkv[:, :, 1], (0, 2, 1, 3))
    v = jnp.transpose(qkv[:, :, 2], (0, 2, 1, 3))

    # -------- pass 2: attention, grid (B, heads, q tiles) ----------------------
    est = (2 * 2 * tq * head_dim * bf16 + 2 * 2 * HWp * head_dim * bf16
           + 4 * tq * HWp * f32)
    o = pl.pallas_call(
        partial(_attention_kernel, hw=HW),
        out_shape=jax.ShapeDtypeStruct((B, num_heads, HWp, head_dim), jnp.bfloat16),
        grid=(B, num_heads, n_rt),
        in_specs=[pl.BlockSpec((1, 1, tq, head_dim), lambda b, h, t: (b, h, t, 0)),
                  pl.BlockSpec((1, 1, HWp, head_dim), lambda b, h, t: (b, h, 0, 0)),
                  pl.BlockSpec((1, 1, HWp, head_dim), lambda b, h, t: (b, h, 0, 0))],
        out_specs=pl.BlockSpec((1, 1, tq, head_dim), lambda b, h, t: (b, h, t, 0)),
        compiler_params=pltpu.CompilerParams(
            dimension_semantics=("parallel", "parallel", "parallel"),
            vmem_limit_bytes=_vmem_limit_bytes(est)),
    )(q, k, v)

    # Head merge for the output projection (cheap XLA transpose of a bf16 tensor).
    o = jnp.transpose(o, (0, 2, 1, 3)).reshape(B, HWp, D)

    # -------- pass 3: output projection + residual + GroupNorm, grid (B,) ------
    est = (2 * HWp * D * bf16 + 4 * HWp * Cp * f32 + D * Cp * bf16
           + 2 * Cp * groups * f32 + 4 * tq * Cp * f32)
    out = pl.pallas_call(
        partial(_proj_norm_kernel, hw=HW, tr=tq, eps=eps),
        out_shape=jax.ShapeDtypeStruct((B, HWp, Cp), jnp.float32),
        grid=(B,),
        in_specs=[pl.BlockSpec((1, HWp, D), lambda b: (b, 0, 0)),
                  pl.BlockSpec((1, HWp, Cp), lambda b: (b, 0, 0)),
                  const_spec((D, Cp)), const_spec((1, Cp)),
                  const_spec((1, Cp)), const_spec((1, Cp)),
                  const_spec((Cp, groups)), const_spec((groups, Cp))],
        out_specs=pl.BlockSpec((1, HWp, Cp), lambda b: (b, 0, 0)),
        compiler_params=pltpu.CompilerParams(
            dimension_semantics=("parallel",),
            vmem_limit_bytes=_vmem_limit_bytes(est)),
    )(o, x_flat, wp, bp, gamma, beta, red, bcast)

    out = out[:, :HW, :C]
    return jnp.transpose(out.reshape(B, H, W, C), (0, 3, 1, 2))


def self_attention_pallas(x_nchw, params, *, num_heads, head_dim, groups, eps=1e-5):
    try:
        out = _forward(x_nchw, params, num_heads, head_dim, groups, eps, True)
        return jax.block_until_ready(out)
    except Exception:
        # Fallback for JAX builds without pipeline_mode=pl.Buffered(1) support.
        return _forward(x_nchw, params, num_heads, head_dim, groups, eps, False)


# --------------------------------------------------------------------------- #
# Pure-JAX reference (matches the PyTorch forward exactly) + params + test
# --------------------------------------------------------------------------- #
def self_attention_reference(x_nchw, params, *, num_heads, head_dim, groups, eps=1e-5):
    B, C, H, W = x_nchw.shape
    HW = H * W
    D = num_heads * head_dim
    scale = head_dim ** (-0.5)
    xf = jnp.transpose(x_nchw, (0, 2, 3, 1)).reshape(B, HW, C)
    q = xf @ params["wq"] + params["bq"]
    k = xf @ params["wk"] + params["bk"]
    v = xf @ params["wv"] + params["bv"]
    qh = q.reshape(B, HW, num_heads, head_dim).transpose(0, 2, 1, 3)
    kh = k.reshape(B, HW, num_heads, head_dim).transpose(0, 2, 1, 3)
    vh = v.reshape(B, HW, num_heads, head_dim).transpose(0, 2, 1, 3)
    s = jnp.einsum('bhqd,bhkd->bhqk', qh, kh) * scale
    p = jax.nn.softmax(s, axis=-1)
    o = jnp.einsum('bhqk,bhkd->bhqd', p, vh).transpose(0, 2, 1, 3).reshape(B, HW, D)
    r = xf + (o @ params["wp"] + params["bp"])
    rg = r.reshape(B, HW, groups, C // groups)
    mu = rg.mean(axis=(1, 3), keepdims=True)
    var = ((rg - mu) ** 2).mean(axis=(1, 3), keepdims=True)
    rn = ((rg - mu) * jax.lax.rsqrt(var + eps)).reshape(B, HW, C)
    rn = rn * params["gamma"] + params["beta"]
    return jnp.transpose(rn.reshape(B, H, W, C), (0, 3, 1, 2))


def init_params(key, in_channels, num_heads, head_dim):
    D = num_heads * head_dim
    ks = jax.random.split(key, 10)
    scl = 0.05
    return {
        # Conv2d(k=1) weights stored pre-transposed as (C_in, C_out) for the matmul.
        "wq": scl * jax.random.normal(ks[0], (in_channels, D), jnp.float32),
        "bq": scl * jax.random.normal(ks[1], (1, D), jnp.float32),
        "wk": scl * jax.random.normal(ks[2], (in_channels, D), jnp.float32),
        "bk": scl * jax.random.normal(ks[3], (1, D), jnp.float32),
        "wv": scl * jax.random.normal(ks[4], (in_channels, D), jnp.float32),
        "bv": scl * jax.random.normal(ks[5], (1, D), jnp.float32),
        "wp": scl * jax.random.normal(ks[6], (D, in_channels), jnp.float32),
        "bp": scl * jax.random.normal(ks[7], (1, in_channels), jnp.float32),
        "gamma": 1.0 + scl * jax.random.normal(ks[8], (1, in_channels), jnp.float32),
        "beta": scl * jax.random.normal(ks[9], (1, in_channels), jnp.float32),
    }


if __name__ == "__main__":
    # Small but representative config; HW = 144 is padded to 256 tokens, so the
    # padded-key softmax mask and the padded-row GroupNorm mask are both exercised.
    B, C, H, W = 2, 32, 12, 12
    num_heads, head_dim, groups = 2, 32, 4

    key = jax.random.PRNGKey(0)
    kx, kp = jax.random.split(key)
    x = jax.random.normal(kx, (B, C, H, W), jnp.float32)
    params = init_params(kp, C, num_heads, head_dim)

    out = self_attention_pallas(x, params, num_heads=num_heads,
                                head_dim=head_dim, groups=groups)
    out = jax.block_until_ready(out)

    ref = self_attention_reference(x, params, num_heads=num_heads,
                                   head_dim=head_dim, groups=groups)
    assert out.shape == (B, C, H, W)
    assert bool(jnp.all(jnp.isfinite(out)))
    max_err = float(jnp.max(jnp.abs(out - ref)))
    # bf16 MXU matmuls (f32 accumulation) vs the pure-f32 reference.
    assert bool(jnp.allclose(out, ref, atol=2e-2, rtol=2e-2)), max_err

    print("KERNEL_OK")
</pallas_src>

<mosaic_0001>
module attributes {stable_mosaic.version = 11 : i64} {
  func.func @_qkv_proj_kernel(%arg0: i32, %arg1: i32, %arg2: memref<1x256x128xf32, #tpu.memory_space<vmem>>, %arg3: memref<128x192xbf16, #tpu.memory_space<vmem>>, %arg4: memref<1x192xf32, #tpu.memory_space<vmem>>, %arg5: memref<1x256x192xbf16, #tpu.memory_space<vmem>>) attributes {dimension_semantics = [#tpu.dimension_semantics<parallel>, #tpu.dimension_semantics<parallel>], iteration_bounds = array<i64: 2, 1>, scalar_prefetch = 0 : i64, scratch_operands = 0 : i64, tpu.core_type = #tpu.core_type<tc>, window_params = [{transform_indices = @transform_0, window_bounds = array<i64: 1, 256, 128>}, {pipeline_mode = #tpu.pipeline_mode<synchronous>, transform_indices = @transform_1, window_bounds = array<i64: 128, 192>}, {pipeline_mode = #tpu.pipeline_mode<synchronous>, transform_indices = @transform_2, window_bounds = array<i64: 1, 192>}, {transform_indices = @transform_3, window_bounds = array<i64: 1, 256, 192>}]} {
    %c0 = arith.constant 0 : index
    %c0_0 = arith.constant 0 : index
    %c0_1 = arith.constant 0 : index
    %0 = vector.load %arg2[%c0, %c0_0, %c0_1] : memref<1x256x128xf32, #tpu.memory_space<vmem>>, vector<1x256x128xf32>
    %1 = vector.shape_cast %0 : vector<1x256x128xf32> to vector<256x128xf32>
    %2 = arith.truncf %1 : vector<256x128xf32> to vector<256x128xbf16>
    %c0_2 = arith.constant 0 : index
    %c0_3 = arith.constant 0 : index
    %3 = vector.load %arg3[%c0_2, %c0_3] : memref<128x192xbf16, #tpu.memory_space<vmem>>, vector<128x192xbf16>
    %cst = arith.constant dense<0.000000e+00> : vector<256x192xf32>
    %4 = tpu.matmul %2, %3, %cst {dimension_numbers = #tpu.dot_dimension_numbers<[1], [0], [0], [1], [0, 0, 1, 1], [], []>} : vector<256x128xbf16>, vector<128x192xbf16>, vector<256x192xf32> -> vector<256x192xf32>
    %c0_4 = arith.constant 0 : index
    %c0_5 = arith.constant 0 : index
    %5 = vector.load %arg4[%c0_4, %c0_5] : memref<1x192xf32, #tpu.memory_space<vmem>>, vector<1x192xf32>
    %6 = vector.broadcast %5 : vector<1x192xf32> to vector<256x192xf32>
    %7 = arith.addf %4, %6 : vector<256x192xf32>
    %8 = arith.truncf %7 : vector<256x192xf32> to vector<256x192xbf16>
    %c0_6 = arith.constant 0 : index
    %c0_7 = arith.constant 0 : index
    %c0_8 = arith.constant 0 : index
    %9 = vector.load %arg5[%c0_6, %c0_7, %c0_8] : memref<1x256x192xbf16, #tpu.memory_space<vmem>>, vector<1x256x192xbf16>
    %10 = vector.shape_cast %9 : vector<1x256x192xbf16> to vector<256x192xbf16>
    %11 = vector.shape_cast %8 : vector<256x192xbf16> to vector<1x256x192xbf16>
    tpu.vector_store %arg5[%c0_6, %c0_7, %c0_8], %11 {strides = array<i32>} : memref<1x256x192xbf16, #tpu.memory_space<vmem>>, vector<1x256x192xbf16>,
    return
  }
  func.func @transform_0(%arg0: i32, %arg1: i32) -> (i32, i32, i32) {
    %c0_i32 = arith.constant 0 : i32
    %c0_i32_0 = arith.constant 0 : i32
    return %arg0, %arg1, %c0_i32 : i32, i32, i32
  }
  func.func @transform_1(%arg0: i32, %arg1: i32) -> (i32, i32) {
    %c0_i32 = arith.constant 0 : i32
    %c0_i32_0 = arith.constant 0 : i32
    %c0_i32_1 = arith.constant 0 : i32
    return %c0_i32, %c0_i32_0 : i32, i32
  }
  func.func @transform_2(%arg0: i32, %arg1: i32) -> (i32, i32) {
    %c0_i32 = arith.constant 0 : i32
    %c0_i32_0 = arith.constant 0 : i32
    %c0_i32_1 = arith.constant 0 : i32
    return %c0_i32, %c0_i32_0 : i32, i32
  }
  func.func @transform_3(%arg0: i32, %arg1: i32) -> (i32, i32, i32) {
    %c0_i32 = arith.constant 0 : i32
    %c0_i32_0 = arith.constant 0 : i32
    return %arg0, %arg1, %c0_i32 : i32, i32, i32
  }
}

module attributes {stable_mosaic.version = 11 : i64} {
  func.func @_qkv_proj_kernel(%arg0: i32, %arg1: i32, %arg2: memref<1x256x128xf32, #tpu.memory_space<vmem>>, %arg3: memref<128x192xbf16, #tpu.memory_space<vmem>>, %arg4: memref<1x192xf32, #tpu.memory_space<vmem>>, %arg5: memref<1x256x192xbf16, #tpu.memory_space<vmem>>) attributes {dimension_semantics = [#tpu.dimension_semantics<parallel>, #tpu.dimension_semantics<parallel>], iteration_bounds = array<i64: 2, 1>, scalar_prefetch = 0 : i64, scratch_operands = 0 : i64, tpu.core_type = #tpu.core_type<tc>, window_params = [{transform_indices = @transform_0, window_bounds = array<i64: 1, 256, 128>}, {pipeline_mode = #tpu.pipeline_mode<synchronous>, transform_indices = @transform_1, window_bounds = array<i64: 128, 192>}, {pipeline_mode = #tpu.pipeline_mode<synchronous>, transform_indices = @transform_2, window_bounds = array<i64: 1, 192>}, {transform_indices = @transform_3, window_bounds = array<i64: 1, 256, 192>}]} {
    %c0 = arith.constant 0 : index
    %c0_0 = arith.constant 0 : index
    %c0_1 = arith.constant 0 : index
    %0 = vector.load %arg2[%c0, %c0_0, %c0_1] : memref<1x256x128xf32, #tpu.memory_space<vmem>>, vector<1x256x128xf32>
    %1 = vector.shape_cast %0 : vector<1x256x128xf32> to vector<256x128xf32>
    %2 = arith.truncf %1 : vector<256x128xf32> to vector<256x128xbf16>
    %c0_2 = arith.constant 0 : index
    %c0_3 = arith.constant 0 : index
    %3 = vector.load %arg3[%c0_2, %c0_3] : memref<128x192xbf16, #tpu.memory_space<vmem>>, vector<128x192xbf16>
    %cst = arith.constant dense<0.000000e+00> : vector<256x192xf32>
    %4 = tpu.matmul %2, %3, %cst {dimension_numbers = #tpu.dot_dimension_numbers<[1], [0], [0], [1], [0, 0, 1, 1], [], []>} : vector<256x128xbf16>, vector<128x192xbf16>, vector<256x192xf32> -> vector<256x192xf32>
    %c0_4 = arith.constant 0 : index
    %c0_5 = arith.constant 0 : index
    %5 = vector.load %arg4[%c0_4, %c0_5] : memref<1x192xf32, #tpu.memory_space<vmem>>, vector<1x192xf32>
    %6 = vector.broadcast %5 : vector<1x192xf32> to vector<256x192xf32>
    %7 = arith.addf %4, %6 : vector<256x192xf32>
    %8 = arith.truncf %7 : vector<256x192xf32> to vector<256x192xbf16>
    %c0_6 = arith.constant 0 : index
    %c0_7 = arith.constant 0 : index
    %c0_8 = arith.constant 0 : index
    %9 = vector.load %arg5[%c0_6, %c0_7, %c0_8] : memref<1x256x192xbf16, #tpu.memory_space<vmem>>, vector<1x256x192xbf16>
    %10 = vector.shape_cast %9 : vector<1x256x192xbf16> to vector<256x192xbf16>
    %11 = vector.shape_cast %8 : vector<256x192xbf16> to vector<1x256x192xbf16>
    tpu.vector_store %arg5[%c0_6, %c0_7, %c0_8], %11 {strides = array<i32>} : memref<1x256x192xbf16, #tpu.memory_space<vmem>>, vector<1x256x192xbf16>,
    return
  }
  func.func @transform_0(%arg0: i32, %arg1: i32) -> (i32, i32, i32) {
    %c0_i32 = arith.constant 0 : i32
    %c0_i32_0 = arith.constant 0 : i32
    return %arg0, %arg1, %c0_i32 : i32, i32, i32
  }
  func.func @transform_1(%arg0: i32, %arg1: i32) -> (i32, i32) {
    %c0_i32 = arith.constant 0 : i32
    %c0_i32_0 = arith.constant 0 : i32
    %c0_i32_1 = arith.constant 0 : i32
    return %c0_i32, %c0_i32_0 : i32, i32
  }
  func.func @transform_2(%arg0: i32, %arg1: i32) -> (i32, i32) {
    %c0_i32 = arith.constant 0 : i32
    %c0_i32_0 = arith.constant 0 : i32
    %c0_i32_1 = arith.constant 0 : i32
    return %c0_i32, %c0_i32_0 : i32, i32
  }
  func.func @transform_3(%arg0: i32, %arg1: i32) -> (i32, i32, i32) {
    %c0_i32 = arith.constant 0 : i32
    %c0_i32_0 = arith.constant 0 : i32
    return %arg0, %arg1, %c0_i32 : i32, i32, i32
  }
}

</mosaic_0001>

<llo_original>
// kernel: tpu_custom_call.1
$region0: #{tpu_custom_call.1}
  #allocation0 [shape = 'u32[]', space=smem, size = 0x4, offset = 0x4, fixed_abs, tag = 'smem constant byte address 0x4 - core index']
  #allocation1 [shape = 'u32[144,128]{1,0:T(1,128)}', space=vmem, size = 0x12000, scoped, tag = 'internal scratch']
  %s0 = inlined_call_operand.hbm [shape: f32[2,256,128], index: 0, kind: input, shape index: {}]
  %s1 = inlined_call_operand.vmem [shape: bf16[128,192], index: 1, kind: input, shape index: {}]
  %s2 = inlined_call_operand.vmem [shape: f32[1,192], index: 2, kind: input, shape index: {}]
  %s3 = inlined_call_operand.vmem [shape: bf16[2,256,192], index: 3, kind: output, shape index: {}]
  %s4 = sld [smem:[#allocation0]]
  $region49: #{tpu_custom_call.1} parent=0
    _
  %s6 = ssub.s32 1, %s4
  %s7 = scalar_select 0, %s6, %s4
  $region1: #{tpu_custom_call.1} parent=0
    #allocation2 [shape = 'u8[262144]{0}', space=vmem, size = 0x40000, scoped, tag = 'input window, operand 0']
    #allocation3 [shape = 's32[2]{0}', space=sflag, size = 0x8, scoped, tag = 'scoped memory for tpu_custom_call.1']
    %8 = vsyncpa [#allocation3], 0
    %s9 = scalar_lea.sflag [#allocation3], 1
    %10 = vsyncpa %s9, 0
    loop: start=0, step=1, limit=4
    $region2: #{tpu_custom_call.1} parent=1 // loop_pre_header
      _
    $region3: #{tpu_custom_call.1} parent=1 // loop_header
      %s12 = sphi 0, %s16
      %p13 = scmp.ge.s32.totalorder %s12, 4
      %s19 = sphi 0, %s31
      %s20 = sphi 0, %s27
      %s21 = sphi 0, %s19
      %s22 = sphi 0, %s20
      %s23 = sphi 0, %s21
      %s24 = sphi 0, %s22
      %s36 = sphi 0, %s38
      %s39 = sphi 0, %s36
      %s40 = sphi 0, %s39
      %s56 = sphi 0, %s40
      %s60 = sphi 0, %s60
      %s62 = sphi 0, %s60
      %s63 = sphi 0, %s62
      %s77 = sphi 0, %s63
      %s81 = sphi 0, %s81
      %s83 = sphi 0, %s81
      %s84 = sphi 0, %s83
      %s98 = sphi 0, %s84
      %s106 = sphi 0, %s108
      %s109 = sphi 0, %s106
      %s110 = sphi 0, %s109
      %s126 = sphi 0, %s110
    $region4: #{tpu_custom_call.1} parent=1 // loop_header_branch
      %15 = sbr.rel (%p13) target = $region8
    $region5: #{tpu_custom_call.1} parent=1 // loop_body
      %s17 = ssub.s32 %s12, 1
      %s18 = ssub.s32 %s12, 2
      %s25 = sadd.s32 1, %s20
      %p26 = scmp.ge.s32.totalorder %s25, 1
      %s27 = scalar_select %p26, 0, %s25
      %s28 = sadd.s32 1, %s19
      %s29 = scalar_select %p26, %s28, %s19
      %p30 = scmp.ge.s32.totalorder %s29, 2
      %s31 = scalar_select %p30, 0, %s29
      %s32 = ssub.s32 %s19, %s31
      %s33 = ssub.s32 %s20, %s27
      %s34 = sor.u32 %s32, %s33
      %p35 = scmp.eq.s32.totalorder %s34, 0
      %s37 = sadd.s32 %s36, 1
      %s38 = scalar_select %p35, %s36, %s37
      %p41 = pneg %p35
      %p42 = scmp.eq.s32.totalorder %s12, 1
      %p43 = por %p41, %p42
      %p44 = scmp.ne.s32.totalorder %s36, %s39
      %p45 = scmp.eq.s32.totalorder %s12, 0
      %p46 = por %p44, %p45
      %p47 = scmp.ne.s32.totalorder %s36, %s39
      %p48 = scmp.eq.s32.totalorder %s17, 1
      %p49 = por %p47, %p48
      %p50 = scmp.ne.s32.totalorder %s39, %s40
      %p51 = scmp.eq.s32.totalorder %s17, 0
      %p52 = por %p50, %p51
      %p53 = scmp.ne.s32.totalorder %s39, %s40
      %p54 = scmp.eq.s32.totalorder %s18, 1
      %p55 = por %p53, %p54
      %p57 = scmp.ne.s32.totalorder %s40, %s56
      %p58 = scmp.eq.s32.totalorder %s18, 0
      %p59 = por %p57, %p58
      %s61 = sadd.s32 %s60, 1
      %p64 = scmp.eq.s32.totalorder %s12, 1
      %p65 = scmp.ne.s32.totalorder %s60, %s62
      %p66 = scmp.eq.s32.totalorder %s12, 0
      %p67 = por %p65, %p66
      %p68 = scmp.ne.s32.totalorder %s60, %s62
      %p69 = scmp.eq.s32.totalorder %s17, 1
      %p70 = por %p68, %p69
      %p71 = scmp.ne.s32.totalorder %s62, %s63
      %p72 = scmp.eq.s32.totalorder %s17, 0
      %p73 = por %p71, %p72
      %p74 = scmp.ne.s32.totalorder %s62, %s63
      %p75 = scmp.eq.s32.totalorder %s18, 1
      %p76 = por %p74, %p75
      %p78 = scmp.ne.s32.totalorder %s63, %s77
      %p79 = scmp.eq.s32.totalorder %s18, 0
      %p80 = por %p78, %p79
      %s82 = sadd.s32 %s81, 1
      %p85 = scmp.eq.s32.totalorder %s12, 1
      %p86 = scmp.ne.s32.totalorder %s81, %s83
      %p87 = scmp.eq.s32.totalorder %s12, 0
      %p88 = por %p86, %p87
      %p89 = scmp.ne.s32.totalorder %s81, %s83
      %p90 = scmp.eq.s32.totalorder %s17, 1
      %p91 = por %p89, %p90
      %p92 = scmp.ne.s32.totalorder %s83, %s84
      %p93 = scmp.eq.s32.totalorder %s17, 0
      %p94 = por %p92, %p93
      %p95 = scmp.ne.s32.totalorder %s83, %s84
      %p96 = scmp.eq.s32.totalorder %s18, 1
      %p97 = por %p95, %p96
      %p99 = scmp.ne.s32.totalorder %s84, %s98
      %p100 = scmp.eq.s32.totalorder %s18, 0
      %p101 = por %p99, %p100
      %s102 = ssub.s32 %s19, %s31
      %s103 = ssub.s32 %s20, %s27
      %s104 = sor.u32 %s102, %s103
      %p105 = scmp.eq.s32.totalorder %s104, 0
      %s107 = sadd.s32 %s106, 1
      %s108 = scalar_select %p105, %s106, %s107
      %p111 = pneg %p105
      %p112 = scmp.eq.s32.totalorder %s12, 1
      %p113 = por %p111, %p112
      %p114 = scmp.ne.s32.totalorder %s106, %s109
      %p115 = scmp.eq.s32.totalorder %s12, 0
      %p116 = por %p114, %p115
      %p117 = scmp.ne.s32.totalorder %s106, %s109
      %p118 = scmp.eq.s32.totalorder %s17, 1
      %p119 = por %p117, %p118
      %p120 = scmp.ne.s32.totalorder %s109, %s110
      %p121 = scmp.eq.s32.totalorder %s17, 0
      %p122 = por %p120, %p121
      %p123 = scmp.ne.s32.totalorder %s109, %s110
      %p124 = scmp.eq.s32.totalorder %s18, 1
      %p125 = por %p123, %p124
      %p127 = scmp.ne.s32.totalorder %s110, %s126
      %p128 = scmp.eq.s32.totalorder %s18, 0
      %p129 = por %p127, %p128
      %p130 = scmp.le.s32.totalorder 1, %s12
      %p131 = scmp.lt.s32.totalorder %s12, 3
      %p132 = pnand %p130, %p131
      %p133 = pneg %p132
      // Predicated region
      $region9: #{tpu_custom_call.1} parent=5 // pred_check
        _
      $region10: #{tpu_custom_call.1} parent=5 // pred_check_branch
        %135 = sbr.rel (%p132) target = $region12
      $region11: #{tpu_custom_call.1} parent=5 // pred_region
        %s136 = ssub.s32 %s12, 1
        // Predicated region
        $region13: #{tpu_custom_call.1} parent=11 // pred_check
          %p137 = pneg %p73
        $region14: #{tpu_custom_call.1} parent=11 // pred_check_branch
          %139 = sbr.rel (%p137) target = $region16
        $region15: #{tpu_custom_call.1} parent=11 // pred_region
          _
        $region16: #{tpu_custom_call.1} parent=11 // pred_fallthru
          _
        // Predicated region
        $region17: #{tpu_custom_call.1} parent=11 // pred_check
          %p140 = pneg %p94
        $region18: #{tpu_custom_call.1} parent=11 // pred_check_branch
          %142 = sbr.rel (%p140) target = $region20
        $region19: #{tpu_custom_call.1} parent=11 // pred_region
          _
        $region20: #{tpu_custom_call.1} parent=11 // pred_fallthru
          _
      $region12: #{tpu_custom_call.1} parent=5 // pred_fallthru
        _
      %p143 = scmp.lt.s32.totalorder %s12, 2
      // Predicated region
      $region21: #{tpu_custom_call.1} parent=5 // pred_check
        %p144 = pneg %p143
      $region22: #{tpu_custom_call.1} parent=5 // pred_check_branch
        %146 = sbr.rel (%p144) target = $region24
      $region23: #{tpu_custom_call.1} parent=5 // pred_region
        // Predicated region
        $region25: #{tpu_custom_call.1} parent=23 // pred_check
          %p147 = pneg %p46
        $region26: #{tpu_custom_call.1} parent=23 // pred_check_branch
          %149 = sbr.rel (%p147) target = $region28
        $region27: #{tpu_custom_call.1} parent=23 // pred_region
          %s150 = sand.u32 %s36, 1
          %s151 = scalar_lea.sflag [#allocation3], %s150
          %s152 = sand.u32 %s36, 1
          %s153 = smul.addr %s152, 256
          %s154 = scalar_lea.vmem [#allocation2], %s153
          %s155 = smul.u32 32, %s20
          %s157 = ssub.s32 4096, 4096
          %158 = vsyncadd %s151, %s157
          %s159 = smul.addr %s19, 32
          %s160 = sadd.s32 %s155, %s159
          %s161 = smul.addr %s160, 128
          %s162 = scalar_lea.hbm %s0, %s161
          %s163 = sshll.u32 %s154, 4
          %s164 = int_to_ptr.vmem [resolvable:$true] %s163
          %169 = dma.hbm_to_vmem [thread:$0]  %s162, 4096, %s164, %s151, 128, 128, 8
        $region28: #{tpu_custom_call.1} parent=23 // pred_fallthru
          _
      $region24: #{tpu_custom_call.1} parent=5 // pred_fallthru
        _
      %p170 = scmp.le.s32.totalorder 1, %s12
      %p171 = scmp.lt.s32.totalorder %s12, 3
      %p172 = pnand %p170, %p171
      %p173 = pneg %p172
      // Predicated region
      $region29: #{tpu_custom_call.1} parent=5 // pred_check
        _
      $region30: #{tpu_custom_call.1} parent=5 // pred_check_branch
        %175 = sbr.rel (%p172) target = $region32
      $region31: #{tpu_custom_call.1} parent=5 // pred_region
        %s176 = ssub.s32 %s12, 1
        %s177 = sand.u32 %s39, 1
        %s178 = scalar_lea.sflag [#allocation3], %s177
        %s179 = sand.u32 %s39, 1
        %s180 = smul.addr %s179, 256
        %s181 = scalar_lea.vmem [#allocation2], %s180
        // Predicated region
        $region33: #{tpu_custom_call.1} parent=31 // pred_check
          %p182 = pneg %p52
        $region34: #{tpu_custom_call.1} parent=31 // pred_check_branch
          %184 = sbr.rel (%p182) target = $region36
        $region35: #{tpu_custom_call.1} parent=31 // pred_region
          %185 = dma.done %s178, 4096
        $region36: #{tpu_custom_call.1} parent=31 // pred_fallthru
          _
        %s186 = sand.u32 %s39, 1
        %s187 = scalar_lea.sflag [#allocation3], %s186
        %s188 = sand.u32 %s39, 1
        %s189 = smul.addr %s188, 256
        %s190 = scalar_lea.vmem [#allocation2], %s189
        %p191 = pneg %p52
        %p192 = pneg %p49
        %p193 = pneg %p73
        %p194 = pneg %p70
        %p195 = pneg %p94
        %p196 = pneg %p91
        %p197 = pneg %p122
        %p198 = pneg %p119
        %s199 = smul.u32 32, %s22
        %p200 = scmp.lt.s32.totalorder %s21, 1
        %s201 = scalar_select %p200, %s21, 1
        %p202 = scmp.lt.s32.totalorder %s199, 31
        %s203 = scalar_select %p202, %s199, 31
        %s204 = smul.addr %s203, 2
        %s205 = smul.addr %s201, 64
        %s206 = sadd.s32 %s204, %s205
        %s207 = smul.addr %s206, 4
        %s208 = scalar_lea.vmem %s3, %s207
        %s209 = smul.u32 32, %s22
        %s210 = smul.u32 32, %s22
        %p211 = scmp.lt.s32.totalorder %s21, 1
        %s212 = scalar_select %p211, %s21, 1
        %p213 = scmp.lt.s32.totalorder %s210, 31
        %s214 = scalar_select %p213, %s210, 31
        %s215 = smul.addr %s214, 2
        %s216 = smul.addr %s212, 64
        %s217 = sadd.s32 %s215, %s216
        %s218 = smul.addr %s217, 4
        %s219 = scalar_lea.vmem %s3, %s218
        %s220 = smul.u32 32, %s22
        %v222 = vld [vmem:[%s181] sm:$0xff]
        %v223 = vld [vmem:[%s181 + $0x8] sm:$0xff]
        %v224 = vld [vmem:[%s181 + $0x10] sm:$0xff]
        %v225 = vld [vmem:[%s181 + $0x18] sm:$0xff]
        %v226 = vld [vmem:[%s181 + $0x20] sm:$0xff]
        %v227 = vld [vmem:[%s181 + $0x28] sm:$0xff]
        %v228 = vld [vmem:[%s181 + $0x30] sm:$0xff]
        %v229 = vld [vmem:[%s181 + $0x38] sm:$0xff]
        %v230 = vld [vmem:[%s181 + $0x40] sm:$0xff]
        %v231 = vld [vmem:[%s181 + $0x48] sm:$0xff]
        %v232 = vld [vmem:[%s181 + $0x50] sm:$0xff]
        %v233 = vld [vmem:[%s181 + $0x58] sm:$0xff]
        %v234 = vld [vmem:[%s181 + $0x60] sm:$0xff]
        %v235 = vld [vmem:[%s181 + $0x68] sm:$0xff]
        %v236 = vld [vmem:[%s181 + $0x70] sm:$0xff]
        %v237 = vld [vmem:[%s181 + $0x78] sm:$0xff]
        %v238 = vld [vmem:[%s181 + $0x80] sm:$0xff]
        %v239 = vld [vmem:[%s181 + $0x88] sm:$0xff]
        %v240 = vld [vmem:[%s181 + $0x90] sm:$0xff]
        %v241 = vld [vmem:[%s181 + $0x98] sm:$0xff]
        %v242 = vld [vmem:[%s181 + $0xa0] sm:$0xff]
        %v243 = vld [vmem:[%s181 + $0xa8] sm:$0xff]
        %v244 = vld [vmem:[%s181 + $0xb0] sm:$0xff]
        %v245 = vld [vmem:[%s181 + $0xb8] sm:$0xff]
        %v246 = vld [vmem:[%s181 + $0xc0] sm:$0xff]
        %v247 = vld [vmem:[%s181 + $0xc8] sm:$0xff]
        %v248 = vld [vmem:[%s181 + $0xd0] sm:$0xff]
        %v249 = vld [vmem:[%s181 + $0xd8] sm:$0xff]
        %v250 = vld [vmem:[%s181 + $0xe0] sm:$0xff]
        %v251 = vld [vmem:[%s181 + $0xe8] sm:$0xff]
        %v252 = vld [vmem:[%s181 + $0xf0] sm:$0xff]
        %v253 = vld [vmem:[%s181 + $0xf8] sm:$0xff]
        %v254 = vpack.c.bf16 %v223, %v222
        %v255 = vpack.c.bf16 %v225, %v224
        %v256 = vpack.c.bf16 %v227, %v226
        %v257 = vpack.c.bf16 %v229, %v228
        %v258 = vpack.c.bf16 %v231, %v230
        %v259 = vpack.c.bf16 %v233, %v232
        %v260 = vpack.c.bf16 %v235, %v234
        %v261 = vpack.c.bf16 %v237, %v236
        %v262 = vpack.c.bf16 %v239, %v238
        %v263 = vpack.c.bf16 %v241, %v240
        %v264 = vpack.c.bf16 %v243, %v242
        %v265 = vpack.c.bf16 %v245, %v244
        %v266 = vpack.c.bf16 %v247, %v246
        %v267 = vpack.c.bf16 %v249, %v248
        %v268 = vpack.c.bf16 %v251, %v250
        %v269 = vpack.c.bf16 %v253, %v252
        %v270 = vld [vmem:[%s1] sm:$0xff]
        %v271 = vld [vmem:[%s1 + $0x8] sm:$0xff]
        %v272 = vld [vmem:[%s1 + $0x10] sm:$0xff]
        %v273 = vld [vmem:[%s1 + $0x18] sm:$0xff]
        %v274 = vld [vmem:[%s1 + $0x20] sm:$0xff]
        %v275 = vld [vmem:[%s1 + $0x28] sm:$0xff]
        %v276 = vld [vmem:[%s1 + $0x30] sm:$0xff]
        %v277 = vld [vmem:[%s1 + $0x38] sm:$0xff]
        %v278 = vld [vmem:[%s1 + $0x40] sm:$0xff]
        %v279 = vld [vmem:[%s1 + $0x48] sm:$0xff]
        %v280 = vld [vmem:[%s1 + $0x50] sm:$0xff]
        %v281 = vld [vmem:[%s1 + $0x58] sm:$0xff]
        %v282 = vld [vmem:[%s1 + $0x60] sm:$0xff]
        %v283 = vld [vmem:[%s1 + $0x68] sm:$0xff]
        %v284 = vld [vmem:[%s1 + $0x70] sm:$0xff]
        %v285 = vld [vmem:[%s1 + $0x78] sm:$0xff]
        %v286 = vld [vmem:[%s2] sm:$0x3]
        %v288 = vlaneseq
        %v289 = vshrl.u32 %v288, 7
        %v290 = vsub.s32 0, %v289
        %v291 = vrot.slane %v286, %v290
        %v292 = vlaneseq
        %v293 = vshrl.u32 %v292, 7
        %v294 = vsub.s32 1, %v293
        %v295 = vrot.slane %v286, %v294
        %v314 = vunpack.c.l.b16 %v270
        %v315 = vunpack.c.h.b16 %v270
        %v316 = vunpack.c.l.b16 %v271
        %v317 = vunpack.c.h.b16 %v271
        %v318 = vunpack.c.l.b16 %v272
        %v319 = vunpack.c.h.b16 %v272
        %v320 = vunpack.c.l.b16 %v273
        %v321 = vunpack.c.h.b16 %v273
        %v322 = vunpack.c.l.b16 %v274
        %v323 = vunpack.c.h.b16 %v274
        %v324 = vunpack.c.l.b16 %v275
        %v325 = vunpack.c.h.b16 %v275
        %v326 = vunpack.c.l.b16 %v276
        %v327 = vunpack.c.h.b16 %v276
        %v328 = vunpack.c.l.b16 %v277
        %v329 = vunpack.c.h.b16 %v277
        %v330 = vunpack.c.l.b16 %v278
        %v331 = vunpack.c.h.b16 %v278
        %v332 = vunpack.c.l.b16 %v279
        %v333 = vunpack.c.h.b16 %v279
        %v334 = vunpack.c.l.b16 %v280
        %v335 = vunpack.c.h.b16 %v280
        %v336 = vunpack.c.l.b16 %v281
        %v337 = vunpack.c.h.b16 %v281
        %v338 = vunpack.c.l.b16 %v282
        %v339 = vunpack.c.h.b16 %v282
        %v340 = vunpack.c.l.b16 %v283
        %v341 = vunpack.c.h.b16 %v283
        %v342 = vunpack.c.l.b16 %v284
        %v343 = vunpack.c.h.b16 %v284
        %v344 = vunpack.c.l.b16 %v285
        %v345 = vunpack.c.h.b16 %v285
        %v346 = vpack.c.b16 %v316, %v314
        %v347 = vpack.c.b16 %v317, %v315
        %v348 = vpack.c.b16 %v320, %v318
        %v349 = vpack.c.b16 %v321, %v319
        %v350 = vpack.c.b16 %v324, %v322
        %v351 = vpack.c.b16 %v325, %v323
        %v352 = vpack.c.b16 %v328, %v326
        %v353 = vpack.c.b16 %v329, %v327
        %v354 = vpack.c.b16 %v332, %v330
        %v355 = vpack.c.b16 %v333, %v331
        %v356 = vpack.c.b16 %v336, %v334
        %v357 = vpack.c.b16 %v337, %v335
        %v358 = vpack.c.b16 %v340, %v338
        %v359 = vpack.c.b16 %v341, %v339
        %v360 = vpack.c.b16 %v344, %v342
        %v361 = vpack.c.b16 %v345, %v343
        %378 = vmatprep.subr.bf16.mxu0 %v347
        %379 = vmatpush1.bf16.msra.mxu0 %v346
        %380 = vmatprep.subr.bf16.mxu0 %v349
        %381 = vmatpush1.bf16.msra.mxu0 %v348
        %382 = vmatprep.subr.bf16.mxu0 %v351
        %383 = vmatpush1.bf16.msra.mxu0 %v350
        %384 = vmatprep.subr.bf16.mxu0 %v353
        %385 = vmatpush1.bf16.msra.mxu0 %v352
        %386 = vmatprep.subr.bf16.mxu0 %v355
        %387 = vmatpush1.bf16.msra.mxu0 %v354
        %388 = vmatprep.subr.bf16.mxu0 %v357
        %389 = vmatpush1.bf16.msra.mxu0 %v356
        %390 = vmatprep.subr.bf16.mxu0 %v359
        %391 = vmatpush1.bf16.msra.mxu0 %v358
        %392 = vmatprep.subr.bf16.mxu0 %v361
        %393 = vmatpush1.bf16.msra.mxu0 %v360
        %394 = vmatprep.subr.bf16.mxu0 0
        %395 = vmatpush1.bf16.msra.mxu0 0
        %396 = vmatprep.subr.bf16.mxu0 0
        %397 = vmatpush1.bf16.msra.mxu0 0
        %398 = vmatprep.subr.bf16.mxu0 0
        %399 = vmatpush1.bf16.msra.mxu0 0
        %400 = vmatprep.subr.bf16.mxu0 0
        %401 = vmatpush1.bf16.msra.mxu0 0
        %402 = vmatprep.subr.bf16.mxu0 0
        %403 = vmatpush1.bf16.msra.mxu0 0
        %404 = vmatprep.subr.bf16.mxu0 0
        %405 = vmatpush1.bf16.msra.mxu0 0
        %406 = vmatprep.subr.bf16.mxu0 0
        %407 = vmatpush1.bf16.msra.mxu0 0
        %408 = vmatprep.subr.bf16.mxu0 0
        %409 = vmatpush1.bf16.msra.mxu0 0
        %410 = vmatprep.mubr.bf16.mxu0 0
        %411 = vmatmul.mubr.bf16.gmra.mrb[0].mxu0 %v254
        %v412 = vpop.f32.mrb[0].mxu0
        %v413 = vadd.f32 %v291, %v412
        %v414 = vpop.f32.mrb[0].mxu0
        %v415 = vadd.f32 %v295, %v414
        %v416 = vpop.f32.mrb[0].mxu0
        %v417 = vadd.f32 %v291, %v416
        %v418 = vpop.f32.mrb[0].mxu0
        %v419 = vadd.f32 %v295, %v418
        %420 = vmatprep.mubr.bf16.mxu0 0
        %421 = vmatmul.mubr.bf16.gmra.mrb[0].mxu0 %v255
        %v422 = vpop.f32.mrb[0].mxu0
        %v423 = vadd.f32 %v291, %v422
        %v424 = vpop.f32.mrb[0].mxu0
        %v425 = vadd.f32 %v295, %v424
        %v426 = vpop.f32.mrb[0].mxu0
        %v427 = vadd.f32 %v291, %v426
        %v428 = vpop.f32.mrb[0].mxu0
        %v429 = vadd.f32 %v295, %v428
        %430 = vmatprep.mubr.bf16.mxu0 0
        %431 = vmatmul.mubr.bf16.gmra.mrb[0].mxu0 %v256
        %v432 = vpop.f32.mrb[0].mxu0
        %v433 = vadd.f32 %v291, %v432
        %v434 = vpop.f32.mrb[0].mxu0
        %v435 = vadd.f32 %v295, %v434
        %v436 = vpop.f32.mrb[0].mxu0
        %v437 = vadd.f32 %v291, %v436
        %v438 = vpop.f32.mrb[0].mxu0
        %v439 = vadd.f32 %v295, %v438
        %440 = vmatprep.mubr.bf16.mxu0 0
        %441 = vmatmul.mubr.bf16.gmra.mrb[0].mxu0 %v257
        %v442 = vpop.f32.mrb[0].mxu0
        %v443 = vadd.f32 %v291, %v442
        %v444 = vpop.f32.mrb[0].mxu0
        %v445 = vadd.f32 %v295, %v444
        %v446 = vpop.f32.mrb[0].mxu0
        %v447 = vadd.f32 %v291, %v446
        %v448 = vpop.f32.mrb[0].mxu0
        %v449 = vadd.f32 %v295, %v448
        %450 = vmatprep.mubr.bf16.mxu0 0
        %451 = vmatmul.mubr.bf16.gmra.mrb[0].mxu0 %v258
        %v452 = vpop.f32.mrb[0].mxu0
        %v453 = vadd.f32 %v291, %v452
        %v454 = vpop.f32.mrb[0].mxu0
        %v455 = vadd.f32 %v295, %v454
        %v456 = vpop.f32.mrb[0].mxu0
        %v457 = vadd.f32 %v291, %v456
        %v458 = vpop.f32.mrb[0].mxu0
        %v459 = vadd.f32 %v295, %v458
        %460 = vmatprep.mubr.bf16.mxu0 0
        %461 = vmatmul.mubr.bf16.gmra.mrb[0].mxu0 %v259
        %v462 = vpop.f32.mrb[0].mxu0
        %v463 = vadd.f32 %v291, %v462
        %v464 = vpop.f32.mrb[0].mxu0
        %v465 = vadd.f32 %v295, %v464
        %v466 = vpop.f32.mrb[0].mxu0
        %v467 = vadd.f32 %v291, %v466
        %v468 = vpop.f32.mrb[0].mxu0
        %v469 = vadd.f32 %v295, %v468
        %470 = vmatprep.mubr.bf16.mxu0 0
        %471 = vmatmul.mubr.bf16.gmra.mrb[0].mxu0 %v260
        %v472 = vpop.f32.mrb[0].mxu0
        %v473 = vadd.f32 %v291, %v472
        %v474 = vpop.f32.mrb[0].mxu0
        %v475 = vadd.f32 %v295, %v474
        %v476 = vpop.f32.mrb[0].mxu0
        %v477 = vadd.f32 %v291, %v476
        %v478 = vpop.f32.mrb[0].mxu0
        %v479 = vadd.f32 %v295, %v478
        %480 = vmatprep.mubr.bf16.mxu0 0
        %481 = vmatmul.mubr.bf16.gmra.mrb[0].mxu0 %v261
        %v482 = vpop.f32.mrb[0].mxu0
        %v483 = vadd.f32 %v291, %v482
        %v484 = vpop.f32.mrb[0].mxu0
        %v485 = vadd.f32 %v295, %v484
        %v486 = vpop.f32.mrb[0].mxu0
        %v487 = vadd.f32 %v291, %v486
        %v488 = vpop.f32.mrb[0].mxu0
        %v489 = vadd.f32 %v295, %v488
        %490 = vmatprep.mubr.bf16.mxu0 0
        %491 = vmatmul.mubr.bf16.gmra.mrb[0].mxu0 %v262
        %v492 = vpop.f32.mrb[0].mxu0
        %v493 = vadd.f32 %v291, %v492
        %v494 = vpop.f32.mrb[0].mxu0
        %v495 = vadd.f32 %v295, %v494
        %v496 = vpop.f32.mrb[0].mxu0
        %v497 = vadd.f32 %v291, %v496
        %v498 = vpop.f32.mrb[0].mxu0
        %v499 = vadd.f32 %v295, %v498
        %500 = vmatprep.mubr.bf16.mxu0 0
        %501 = vmatmul.mubr.bf16.gmra.mrb[0].mxu0 %v263
        %v502 = vpop.f32.mrb[0].mxu0
        %v503 = vadd.f32 %v291, %v502
        %v504 = vpop.f32.mrb[0].mxu0
        %v505 = vadd.f32 %v295, %v504
        %v506 = vpop.f32.mrb[0].mxu0
        %v507 = vadd.f32 %v291, %v506
        %v508 = vpop.f32.mrb[0].mxu0
        %v509 = vadd.f32 %v295, %v508
        %510 = vmatprep.mubr.bf16.mxu0 0
        %511 = vmatmul.mubr.bf16.gmra.mrb[0].mxu0 %v264
        %v512 = vpop.f32.mrb[0].mxu0
        %v513 = vadd.f32 %v291, %v512
        %v514 = vpop.f32.mrb[0].mxu0
        %v515 = vadd.f32 %v295, %v514
        %v516 = vpop.f32.mrb[0].mxu0
        %v517 = vadd.f32 %v291, %v516
        %v518 = vpop.f32.mrb[0].mxu0
        %v519 = vadd.f32 %v295, %v518
        %520 = vmatprep.mubr.bf16.mxu0 0
        %521 = vmatmul.mubr.bf16.gmra.mrb[0].mxu0 %v265
        %v522 = vpop.f32.mrb[0].mxu0
        %v523 = vadd.f32 %v291, %v522
        %v524 = vpop.f32.mrb[0].mxu0
        %v525 = vadd.f32 %v295, %v524
        %v526 = vpop.f32.mrb[0].mxu0
        %v527 = vadd.f32 %v291, %v526
        %v528 = vpop.f32.mrb[0].mxu0
        %v529 = vadd.f32 %v295, %v528
        %530 = vmatprep.mubr.bf16.mxu0 0
        %531 = vmatmul.mubr.bf16.gmra.mrb[0].mxu0 %v266
        %v532 = vpop.f32.mrb[0].mxu0
        %v533 = vadd.f32 %v291, %v532
        %v534 = vpop.f32.mrb[0].mxu0
        %v535 = vadd.f32 %v295, %v534
        %v536 = vpop.f32.mrb[0].mxu0
        %v537 = vadd.f32 %v291, %v536
        %v538 = vpop.f32.mrb[0].mxu0
        %v539 = vadd.f32 %v295, %v538
        %540 = vmatprep.mubr.bf16.mxu0 0
        %541 = vmatmul.mubr.bf16.gmra.mrb[0].mxu0 %v267
        %v542 = vpop.f32.mrb[0].mxu0
        %v543 = vadd.f32 %v291, %v542
        %v544 = vpop.f32.mrb[0].mxu0
        %v545 = vadd.f32 %v295, %v544
        %v546 = vpop.f32.mrb[0].mxu0
        %v547 = vadd.f32 %v291, %v546
        %v548 = vpop.f32.mrb[0].mxu0
        %v549 = vadd.f32 %v295, %v548
        %550 = vmatprep.mubr.bf16.mxu0 0
        %551 = vmatmul.mubr.bf16.gmra.mrb[0].mxu0 %v268
        %v552 = vpop.f32.mrb[0].mxu0
        %v553 = vadd.f32 %v291, %v552
        %v554 = vpop.f32.mrb[0].mxu0
        %v555 = vadd.f32 %v295, %v554
        %v556 = vpop.f32.mrb[0].mxu0
        %v557 = vadd.f32 %v291, %v556
        %v558 = vpop.f32.mrb[0].mxu0
        %v559 = vadd.f32 %v295, %v558
        %560 = vmatprep.mubr.bf16.mxu0 0
        %561 = vmatmul.mubr.bf16.gmra.mrb[0].mxu0 %v269
        %v562 = vpop.f32.mrb[0].mxu0
        %v563 = vadd.f32 %v291, %v562
        %v564 = vpop.f32.mrb[0].mxu0
        %v565 = vadd.f32 %v295, %v564
        %v566 = vpop.f32.mrb[0].mxu0
        %v567 = vadd.f32 %v291, %v566
        %v568 = vpop.f32.mrb[0].mxu0
        %v569 = vadd.f32 %v295, %v568
        %570 = vdwg.mxu0
        %v571 = vpack.c.bf16 %v417, %v413
        %v572 = vpack.c.bf16 %v419, %v415
        %v573 = vpack.c.bf16 %v427, %v423
        %v574 = vpack.c.bf16 %v429, %v425
        %v575 = vpack.c.bf16 %v437, %v433
        %v576 = vpack.c.bf16 %v439, %v435
        %v577 = vpack.c.bf16 %v447, %v443
        %v578 = vpack.c.bf16 %v449, %v445
        %v579 = vpack.c.bf16 %v457, %v453
        %v580 = vpack.c.bf16 %v459, %v455
        %v581 = vpack.c.bf16 %v467, %v463
        %v582 = vpack.c.bf16 %v469, %v465
        %v583 = vpack.c.bf16 %v477, %v473
        %v584 = vpack.c.bf16 %v479, %v475
        %v585 = vpack.c.bf16 %v487, %v483
        %v586 = vpack.c.bf16 %v489, %v485
        %v587 = vpack.c.bf16 %v497, %v493
        %v588 = vpack.c.bf16 %v499, %v495
        %v589 = vpack.c.bf16 %v507, %v503
        %v590 = vpack.c.bf16 %v509, %v505
        %v591 = vpack.c.bf16 %v517, %v513
        %v592 = vpack.c.bf16 %v519, %v515
        %v593 = vpack.c.bf16 %v527, %v523
        %v594 = vpack.c.bf16 %v529, %v525
        %v595 = vpack.c.bf16 %v537, %v533
        %v596 = vpack.c.bf16 %v539, %v535
        %v597 = vpack.c.bf16 %v547, %v543
        %v598 = vpack.c.bf16 %v549, %v545
        %v599 = vpack.c.bf16 %v557, %v553
        %v600 = vpack.c.bf16 %v559, %v555
        %v601 = vpack.c.bf16 %v567, %v563
        %v602 = vpack.c.bf16 %v569, %v565
        %v635 = vunpack.c.l.b16 %v571
        %v636 = vunpack.c.l.b16 %v572
        %v637 = vunpack.c.h.b16 %v571
        %v638 = vunpack.c.h.b16 %v572
        %v639 = vunpack.c.l.b16 %v573
        %v640 = vunpack.c.l.b16 %v574
        %v641 = vunpack.c.h.b16 %v573
        %v642 = vunpack.c.h.b16 %v574
        %v643 = vunpack.c.l.b16 %v575
        %v644 = vunpack.c.l.b16 %v576
        %v645 = vunpack.c.h.b16 %v575
        %v646 = vunpack.c.h.b16 %v576
        %v647 = vunpack.c.l.b16 %v577
        %v648 = vunpack.c.l.b16 %v578
        %v649 = vunpack.c.h.b16 %v577
        %v650 = vunpack.c.h.b16 %v578
        %v651 = vunpack.c.l.b16 %v579
        %v652 = vunpack.c.l.b16 %v580
        %v653 = vunpack.c.h.b16 %v579
        %v654 = vunpack.c.h.b16 %v580
        %v655 = vunpack.c.l.b16 %v581
        %v656 = vunpack.c.l.b16 %v582
        %v657 = vunpack.c.h.b16 %v581
        %v658 = vunpack.c.h.b16 %v582
        %v659 = vunpack.c.l.b16 %v583
        %v660 = vunpack.c.l.b16 %v584
        %v661 = vunpack.c.h.b16 %v583
        %v662 = vunpack.c.h.b16 %v584
        %v663 = vunpack.c.l.b16 %v585
        %v664 = vunpack.c.l.b16 %v586
        %v665 = vunpack.c.h.b16 %v585
        %v666 = vunpack.c.h.b16 %v586
        %v667 = vunpack.c.l.b16 %v587
        %v668 = vunpack.c.l.b16 %v588
        %v669 = vunpack.c.h.b16 %v587
        %v670 = vunpack.c.h.b16 %v588
        %v671 = vunpack.c.l.b16 %v589
        %v672 = vunpack.c.l.b16 %v590
        %v673 = vunpack.c.h.b16 %v589
        %v674 = vunpack.c.h.b16 %v590
        %v675 = vunpack.c.l.b16 %v591
        %v676 = vunpack.c.l.b16 %v592
        %v677 = vunpack.c.h.b16 %v591
        %v678 = vunpack.c.h.b16 %v592
        %v679 = vunpack.c.l.b16 %v593
        %v680 = vunpack.c.l.b16 %v594
        %v681 = vunpack.c.h.b16 %v593
        %v682 = vunpack.c.h.b16 %v594
        %v683 = vunpack.c.l.b16 %v595
        %v684 = vunpack.c.l.b16 %v596
        %v685 = vunpack.c.h.b16 %v595
        %v686 = vunpack.c.h.b16 %v596
        %v687 = vunpack.c.l.b16 %v597
        %v688 = vunpack.c.l.b16 %v598
        %v689 = vunpack.c.h.b16 %v597
        %v690 = vunpack.c.h.b16 %v598
        %v691 = vunpack.c.l.b16 %v599
        %v692 = vunpack.c.l.b16 %v600
        %v693 = vunpack.c.h.b16 %v599
        %v694 = vunpack.c.h.b16 %v600
        %v695 = vunpack.c.l.b16 %v601
        %v696 = vunpack.c.l.b16 %v602
        %v697 = vunpack.c.h.b16 %v601
        %v698 = vunpack.c.h.b16 %v602
        %v699 = vpack.c.b16 %v636, %v635
        %v700 = vpack.c.b16 %v638, %v637
        %v701 = vpack.c.b16 %v640, %v639
        %v702 = vpack.c.b16 %v642, %v641
        %v703 = vpack.c.b16 %v644, %v643
        %v704 = vpack.c.b16 %v646, %v645
        %v705 = vpack.c.b16 %v648, %v647
        %v706 = vpack.c.b16 %v650, %v649
        %v707 = vpack.c.b16 %v652, %v651
        %v708 = vpack.c.b16 %v654, %v653
        %v709 = vpack.c.b16 %v656, %v655
        %v710 = vpack.c.b16 %v658, %v657
        %v711 = vpack.c.b16 %v660, %v659
        %v712 = vpack.c.b16 %v662, %v661
        %v713 = vpack.c.b16 %v664, %v663
        %v714 = vpack.c.b16 %v666, %v665
        %v715 = vpack.c.b16 %v668, %v667
        %v716 = vpack.c.b16 %v670, %v669
        %v717 = vpack.c.b16 %v672, %v671
        %v718 = vpack.c.b16 %v674, %v673
        %v719 = vpack.c.b16 %v676, %v675
        %v720 = vpack.c.b16 %v678, %v677
        %v721 = vpack.c.b16 %v680, %v679
        %v722 = vpack.c.b16 %v682, %v681
        %v723 = vpack.c.b16 %v684, %v683
        %v724 = vpack.c.b16 %v686, %v685
        %v725 = vpack.c.b16 %v688, %v687
        %v726 = vpack.c.b16 %v690, %v689
        %v727 = vpack.c.b16 %v692, %v691
        %v728 = vpack.c.b16 %v694, %v693
        %v729 = vpack.c.b16 %v696, %v695
        %v730 = vpack.c.b16 %v698, %v697
        %vm763 = vcmask 1043456
        %vm764 = vcmask 523268
        %vm765 = vmor %vm764, %vm763
        %766 = vst.msk [vmem:[%s219] sm:$0xff] %vm765, %v699
        %767 = vst.msk [vmem:[%s219 + $0x8] sm:$0xff] %vm765, %v700
        %768 = vst.msk [vmem:[%s219 + $0x10] sm:$0xff] %vm765, %v701
        %769 = vst.msk [vmem:[%s219 + $0x18] sm:$0xff] %vm765, %v702
        %770 = vst.msk [vmem:[%s219 + $0x20] sm:$0xff] %vm765, %v703
        %771 = vst.msk [vmem:[%s219 + $0x28] sm:$0xff] %vm765, %v704
        %772 = vst.msk [vmem:[%s219 + $0x30] sm:$0xff] %vm765, %v705
        %773 = vst.msk [vmem:[%s219 + $0x38] sm:$0xff] %vm765, %v706
        %774 = vst.msk [vmem:[%s219 + $0x40] sm:$0xff] %vm765, %v707
        %775 = vst.msk [vmem:[%s219 + $0x48] sm:$0xff] %vm765, %v708
        %776 = vst.msk [vmem:[%s219 + $0x50] sm:$0xff] %vm765, %v709
        %777 = vst.msk [vmem:[%s219 + $0x58] sm:$0xff] %vm765, %v710
        %778 = vst.msk [vmem:[%s219 + $0x60] sm:$0xff] %vm765, %v711
        %779 = vst.msk [vmem:[%s219 + $0x68] sm:$0xff] %vm765, %v712
        %780 = vst.msk [vmem:[%s219 + $0x70] sm:$0xff] %vm765, %v713
        %781 = vst.msk [vmem:[%s219 + $0x78] sm:$0xff] %vm765, %v714
        %782 = vst.msk [vmem:[%s219 + $0x80] sm:$0xff] %vm765, %v715
        %783 = vst.msk [vmem:[%s219 + $0x88] sm:$0xff] %vm765, %v716
        %784 = vst.msk [vmem:[%s219 + $0x90] sm:$0xff] %vm765, %v717
        %785 = vst.msk [vmem:[%s219 + $0x98] sm:$0xff] %vm765, %v718
        %786 = vst.msk [vmem:[%s219 + $0xa0] sm:$0xff] %vm765, %v719
        %787 = vst.msk [vmem:[%s219 + $0xa8] sm:$0xff] %vm765, %v720
        %788 = vst.msk [vmem:[%s219 + $0xb0] sm:$0xff] %vm765, %v721
        %789 = vst.msk [vmem:[%s219 + $0xb8] sm:$0xff] %vm765, %v722
        %790 = vst.msk [vmem:[%s219 + $0xc0] sm:$0xff] %vm765, %v723
        %791 = vst.msk [vmem:[%s219 + $0xc8] sm:$0xff] %vm765, %v724
        %792 = vst.msk [vmem:[%s219 + $0xd0] sm:$0xff] %vm765, %v725
        %793 = vst.msk [vmem:[%s219 + $0xd8] sm:$0xff] %vm765, %v726
        %794 = vst.msk [vmem:[%s219 + $0xe0] sm:$0xff] %vm765, %v727
        %795 = vst.msk [vmem:[%s219 + $0xe8] sm:$0xff] %vm765, %v728
        %796 = vst.msk [vmem:[%s219 + $0xf0] sm:$0xff] %vm765, %v729
        %797 = vst.msk [vmem:[%s219 + $0xf8] sm:$0xff] %vm765, %v730
        %s798 = smul.u32 32, %s22
        %p799 = scmp.lt.s32.totalorder %s21, 1
        %s800 = scalar_select %p799, %s21, 1
        %p801 = scmp.lt.s32.totalorder %s798, 31
        %s802 = scalar_select %p801, %s798, 31
        %s803 = smul.addr %s802, 2
        %s804 = smul.addr %s800, 64
        %s805 = sadd.s32 %s803, %s804
        %s806 = smul.addr %s805, 4
        %s807 = scalar_lea.vmem %s3, %s806
        // Predicated region
        $region37: #{tpu_custom_call.1} parent=31 // pred_check
          %p808 = pneg %p119
        $region38: #{tpu_custom_call.1} parent=31 // pred_check_branch
          %810 = sbr.rel (%p808) target = $region40
        $region39: #{tpu_custom_call.1} parent=31 // pred_region
          %s811 = smul.u32 32, %s22
        $region40: #{tpu_custom_call.1} parent=31 // pred_fallthru
          _
      $region32: #{tpu_custom_call.1} parent=5 // pred_fallthru
        _
      %p812 = scmp.le.s32.totalorder 2, %s12
      // Predicated region
      $region41: #{tpu_custom_call.1} parent=5 // pred_check
        %p813 = pneg %p812
      $region42: #{tpu_custom_call.1} parent=5 // pred_check_branch
        %815 = sbr.rel (%p813) target = $region44
      $region43: #{tpu_custom_call.1} parent=5 // pred_region
        %s816 = ssub.s32 %s12, 2
        // Predicated region
        $region45: #{tpu_custom_call.1} parent=43 // pred_check
          %p817 = pneg %p125
        $region46: #{tpu_custom_call.1} parent=43 // pred_check_branch
          %819 = sbr.rel (%p817) target = $region48
        $region47: #{tpu_custom_call.1} parent=43 // pred_region
          %s820 = smul.u32 32, %s24
          %p821 = scmp.lt.s32.totalorder %s23, 1
          %s822 = scalar_select %p821, %s23, 1
          %p823 = scmp.lt.s32.totalorder %s820, 31
          %s824 = scalar_select %p823, %s820, 31
          %s825 = smul.addr %s824, 2
          %s826 = smul.addr %s822, 64
          %s827 = sadd.s32 %s825, %s826
          %s828 = smul.addr %s827, 4
          %s829 = scalar_lea.vmem %s3, %s828
        $region48: #{tpu_custom_call.1} parent=43 // pred_fallthru
          _
      $region44: #{tpu_custom_call.1} parent=5 // pred_fallthru
        _
    $region6: #{tpu_custom_call.1} parent=1 // loop_footer
      %s16 = sadd.s32 1, %s12
    $region7: #{tpu_custom_call.1} parent=1 // loop_footer_branch
      %11 = sbr.rel target = $region3
    $region8: #{tpu_custom_call.1} parent=1 // loop_exit
      _
    %830 = vsyncpa [#allocation3], 1
    %s831 = scalar_lea.sflag [#allocation3], 1
    %832 = vsyncpa %s831, 1

// kernel: tpu_custom_call.1
$region0: #{tpu_custom_call.1}
  #allocation0 [shape = 'u32[]', space=smem, size = 0x4, offset = 0x4, fixed_abs, tag = 'smem constant byte address 0x4 - core index']
  #allocation1 [shape = 'u32[144,128]{1,0:T(1,128)}', space=vmem, size = 0x12000, scoped, tag = 'internal scratch']
  %s0 = inlined_call_operand.hbm [shape: f32[2,256,128], index: 0, kind: input, shape index: {}]
  %s1 = inlined_call_operand.vmem [shape: bf16[128,192], index: 1, kind: input, shape index: {}]
  %s2 = inlined_call_operand.vmem [shape: f32[1,192], index: 2, kind: input, shape index: {}]
  %s3 = inlined_call_operand.vmem [shape: bf16[2,256,192], index: 3, kind: output, shape index: {}]
  %s4 = sld [smem:[#allocation0]]
  $region49: #{tpu_custom_call.1} parent=0
    _
  %s6 = ssub.s32 1, %s4
  %s7 = scalar_select 0, %s6, %s4
  $region1: #{tpu_custom_call.1} parent=0
    #allocation2 [shape = 'u8[262144]{0}', space=vmem, size = 0x40000, scoped, tag = 'input window, operand 0']
    #allocation3 [shape = 's32[2]{0}', space=sflag, size = 0x8, scoped, tag = 'scoped memory for tpu_custom_call.1']
    %8 = vsyncpa [#allocation3], 0
    %s9 = scalar_lea.sflag [#allocation3], 1
    %10 = vsyncpa %s9, 0
    loop: start=0, step=1, limit=4
    $region2: #{tpu_custom_call.1} parent=1 // loop_pre_header
      _
    $region3: #{tpu_custom_call.1} parent=1 // loop_header
      %s12 = sphi 0, %s16
      %p13 = scmp.ge.s32.totalorder %s12, 4
      %s19 = sphi 0, %s31
      %s20 = sphi 0, %s27
      %s21 = sphi 0, %s19
      %s22 = sphi 0, %s20
      %s23 = sphi 0, %s21
      %s24 = sphi 0, %s22
      %s36 = sphi 0, %s38
      %s39 = sphi 0, %s36
      %s40 = sphi 0, %s39
      %s56 = sphi 0, %s40
      %s60 = sphi 0, %s60
      %s62 = sphi 0, %s60
      %s63 = sphi 0, %s62
      %s77 = sphi 0, %s63
      %s81 = sphi 0, %s81
      %s83 = sphi 0, %s81
      %s84 = sphi 0, %s83
      %s98 = sphi 0, %s84
      %s106 = sphi 0, %s108
      %s109 = sphi 0, %s106
      %s110 = sphi 0, %s109
      %s126 = sphi 0, %s110
    $region4: #{tpu_custom_call.1} parent=1 // loop_header_branch
      %15 = sbr.rel (%p13) target = $region8
    $region5: #{tpu_custom_call.1} parent=1 // loop_body
      %s17 = ssub.s32 %s12, 1
      %s18 = ssub.s32 %s12, 2
      %s25 = sadd.s32 1, %s20
      %p26 = scmp.ge.s32.totalorder %s25, 1
      %s27 = scalar_select %p26, 0, %s25
      %s28 = sadd.s32 1, %s19
      %s29 = scalar_select %p26, %s28, %s19
      %p30 = scmp.ge.s32.totalorder %s29, 2
      %s31 = scalar_select %p30, 0, %s29
      %s32 = ssub.s32 %s19, %s31
      %s33 = ssub.s32 %s20, %s27
      %s34 = sor.u32 %s32, %s33
      %p35 = scmp.eq.s32.totalorder %s34, 0
      %s37 = sadd.s32 %s36, 1
      %s38 = scalar_select %p35, %s36, %s37
      %p41 = pneg %p35
      %p42 = scmp.eq.s32.totalorder %s12, 1
      %p43 = por %p41, %p42
      %p44 = scmp.ne.s32.totalorder %s36, %s39
      %p45 = scmp.eq.s32.totalorder %s12, 0
      %p46 = por %p44, %p45
      %p47 = scmp.ne.s32.totalorder %s36, %s39
      %p48 = scmp.eq.s32.totalorder %s17, 1
      %p49 = por %p47, %p48
      %p50 = scmp.ne.s32.totalorder %s39, %s40
      %p51 = scmp.eq.s32.totalorder %s17, 0
      %p52 = por %p50, %p51
      %p53 = scmp.ne.s32.totalorder %s39, %s40
      %p54 = scmp.eq.s32.totalorder %s18, 1
      %p55 = por %p53, %p54
      %p57 = scmp.ne.s32.totalorder %s40, %s56
      %p58 = scmp.eq.s32.totalorder %s18, 0
      %p59 = por %p57, %p58
      %s61 = sadd.s32 %s60, 1
      %p64 = scmp.eq.s32.totalorder %s12, 1
      %p65 = scmp.ne.s32.totalorder %s60, %s62
      %p66 = scmp.eq.s32.totalorder %s12, 0
      %p67 = por %p65, %p66
      %p68 = scmp.ne.s32.totalorder %s60, %s62
      %p69 = scmp.eq.s32.totalorder %s17, 1
      %p70 = por %p68, %p69
      %p71 = scmp.ne.s32.totalorder %s62, %s63
      %p72 = scmp.eq.s32.totalorder %s17, 0
      %p73 = por %p71, %p72
      %p74 = scmp.ne.s32.totalorder %s62, %s63
      %p75 = scmp.eq.s32.totalorder %s18, 1
      %p76 = por %p74, %p75
      %p78 = scmp.ne.s32.totalorder %s63, %s77
      %p79 = scmp.eq.s32.totalorder %s18, 0
      %p80 = por %p78, %p79
      %s82 = sadd.s32 %s81, 1
      %p85 = scmp.eq.s32.totalorder %s12, 1
      %p86 = scmp.ne.s32.totalorder %s81, %s83
      %p87 = scmp.eq.s32.totalorder %s12, 0
      %p88 = por %p86, %p87
      %p89 = scmp.ne.s32.totalorder %s81, %s83
      %p90 = scmp.eq.s32.totalorder %s17, 1
      %p91 = por %p89, %p90
      %p92 = scmp.ne.s32.totalorder %s83, %s84
      %p93 = scmp.eq.s32.totalorder %s17, 0
      %p94 = por %p92, %p93
      %p95 = scmp.ne.s32.totalorder %s83, %s84
      %p96 = scmp.eq.s32.totalorder %s18, 1
      %p97 = por %p95, %p96
      %p99 = scmp.ne.s32.totalorder %s84, %s98
      %p100 = scmp.eq.s32.totalorder %s18, 0
      %p101 = por %p99, %p100
      %s102 = ssub.s32 %s19, %s31
      %s103 = ssub.s32 %s20, %s27
      %s104 = sor.u32 %s102, %s103
      %p105 = scmp.eq.s32.totalorder %s104, 0
      %s107 = sadd.s32 %s106, 1
      %s108 = scalar_select %p105, %s106, %s107
      %p111 = pneg %p105
      %p112 = scmp.eq.s32.totalorder %s12, 1
      %p113 = por %p111, %p112
      %p114 = scmp.ne.s32.totalorder %s106, %s109
      %p115 = scmp.eq.s32.totalorder %s12, 0
      %p116 = por %p114, %p115
      %p117 = scmp.ne.s32.totalorder %s106, %s109
      %p118 = scmp.eq.s32.totalorder %s17, 1
      %p119 = por %p117, %p118
      %p120 = scmp.ne.s32.totalorder %s109, %s110
      %p121 = scmp.eq.s32.totalorder %s17, 0
      %p122 = por %p120, %p121
      %p123 = scmp.ne.s32.totalorder %s109, %s110
      %p124 = scmp.eq.s32.totalorder %s18, 1
      %p125 = por %p123, %p124
      %p127 = scmp.ne.s32.totalorder %s110, %s126
      %p128 = scmp.eq.s32.totalorder %s18, 0
      %p129 = por %p127, %p128
      %p130 = scmp.le.s32.totalorder 1, %s12
      %p131 = scmp.lt.s32.totalorder %s12, 3
      %p132 = pnand %p130, %p131
      %p133 = pneg %p132
      // Predicated region
      $region9: #{tpu_custom_call.1} parent=5 // pred_check
        _
      $region10: #{tpu_custom_call.1} parent=5 // pred_check_branch
        %135 = sbr.rel (%p132) target = $region12
      $region11: #{tpu_custom_call.1} parent=5 // pred_region
        %s136 = ssub.s32 %s12, 1
        // Predicated region
        $region13: #{tpu_custom_call.1} parent=11 // pred_check
          %p137 = pneg %p73
        $region14: #{tpu_custom_call.1} parent=11 // pred_check_branch
          %139 = sbr.rel (%p137) target = $region16
        $region15: #{tpu_custom_call.1} parent=11 // pred_region
          _
        $region16: #{tpu_custom_call.1} parent=11 // pred_fallthru
          _
        // Predicated region
        $region17: #{tpu_custom_call.1} parent=11 // pred_check
          %p140 = pneg %p94
        $region18: #{tpu_custom_call.1} parent=11 // pred_check_branch
          %142 = sbr.rel (%p140) target = $region20
        $region19: #{tpu_custom_call.1} parent=11 // pred_region
          _
        $region20: #{tpu_custom_call.1} parent=11 // pred_fallthru
          _
      $region12: #{tpu_custom_call.1} parent=5 // pred_fallthru
        _
      %p143 = scmp.lt.s32.totalorder %s12, 2
      // Predicated region
      $region21: #{tpu_custom_call.1} parent=5 // pred_check
        %p144 = pneg %p143
      $region22: #{tpu_custom_call.1} parent=5 // pred_check_branch
        %146 = sbr.rel (%p144) target = $region24
      $region23: #{tpu_custom_call.1} parent=5 // pred_region
        // Predicated region
        $region25: #{tpu_custom_call.1} parent=23 // pred_check
          %p147 = pneg %p46
        $region26: #{tpu_custom_call.1} parent=23 // pred_check_branch
          %149 = sbr.rel (%p147) target = $region28
        $region27: #{tpu_custom_call.1} parent=23 // pred_region
          %s150 = sand.u32 %s36, 1
          %s151 = scalar_lea.sflag [#allocation3], %s150
          %s152 = sand.u32 %s36, 1
          %s153 = smul.addr %s152, 256
          %s154 = scalar_lea.vmem [#allocation2], %s153
          %s155 = smul.u32 32, %s20
          %s157 = ssub.s32 4096, 4096
          %158 = vsyncadd %s151, %s157
          %s159 = smul.addr %s19, 32
          %s160 = sadd.s32 %s155, %s159
          %s161 = smul.addr %s160, 128
          %s162 = scalar_lea.hbm %s0, %s161
          %s163 = sshll.u32 %s154, 4
          %s164 = int_to_ptr.vmem [resolvable:$true] %s163
          %169 = dma.hbm_to_vmem [thread:$0]  %s162, 4096, %s164, %s151, 128, 128, 8
        $region28: #{tpu_custom_call.1} parent=23 // pred_fallthru
          _
      $region24: #{tpu_custom_call.1} parent=5 // pred_fallthru
        _
      %p170 = scmp.le.s32.totalorder 1, %s12
      %p171 = scmp.lt.s32.totalorder %s12, 3
      %p172 = pnand %p170, %p171
      %p173 = pneg %p172
      // Predicated region
      $region29: #{tpu_custom_call.1} parent=5 // pred_check
        _
      $region30: #{tpu_custom_call.1} parent=5 // pred_check_branch
        %175 = sbr.rel (%p172) target = $region32
      $region31: #{tpu_custom_call.1} parent=5 // pred_region
        %s176 = ssub.s32 %s12, 1
        %s177 = sand.u32 %s39, 1
        %s178 = scalar_lea.sflag [#allocation3], %s177
        %s179 = sand.u32 %s39, 1
        %s180 = smul.addr %s179, 256
        %s181 = scalar_lea.vmem [#allocation2], %s180
        // Predicated region
        $region33: #{tpu_custom_call.1} parent=31 // pred_check
          %p182 = pneg %p52
        $region34: #{tpu_custom_call.1} parent=31 // pred_check_branch
          %184 = sbr.rel (%p182) target = $region36
        $region35: #{tpu_custom_call.1} parent=31 // pred_region
          %185 = dma.done %s178, 4096
        $region36: #{tpu_custom_call.1} parent=31 // pred_fallthru
          _
        %s186 = sand.u32 %s39, 1
        %s187 = scalar_lea.sflag [#allocation3], %s186
        %s188 = sand.u32 %s39, 1
        %s189 = smul.addr %s188, 256
        %s190 = scalar_lea.vmem [#allocation2], %s189
        %p191 = pneg %p52
        %p192 = pneg %p49
        %p193 = pneg %p73
        %p194 = pneg %p70
        %p195 = pneg %p94
        %p196 = pneg %p91
        %p197 = pneg %p122
        %p198 = pneg %p119
        %s199 = smul.u32 32, %s22
        %p200 = scmp.lt.s32.totalorder %s21, 1
        %s201 = scalar_select %p200, %s21, 1
        %p202 = scmp.lt.s32.totalorder %s199, 31
        %s203 = scalar_select %p202, %s199, 31
        %s204 = smul.addr %s203, 2
        %s205 = smul.addr %s201, 64
        %s206 = sadd.s32 %s204, %s205
        %s207 = smul.addr %s206, 4
        %s208 = scalar_lea.vmem %s3, %s207
        %s209 = smul.u32 32, %s22
        %s210 = smul.u32 32, %s22
        %p211 = scmp.lt.s32.totalorder %s21, 1
        %s212 = scalar_select %p211, %s21, 1
        %p213 = scmp.lt.s32.totalorder %s210, 31
        %s214 = scalar_select %p213, %s210, 31
        %s215 = smul.addr %s214, 2
        %s216 = smul.addr %s212, 64
        %s217 = sadd.s32 %s215, %s216
        %s218 = smul.addr %s217, 4
        %s219 = scalar_lea.vmem %s3, %s218
        %s220 = smul.u32 32, %s22
        %v222 = vld [vmem:[%s181] sm:$0xff]
        %v223 = vld [vmem:[%s181 + $0x8] sm:$0xff]
        %v224 = vld [vmem:[%s181 + $0x10] sm:$0xff]
        %v225 = vld [vmem:[%s181 + $0x18] sm:$0xff]
        %v226 = vld [vmem:[%s181 + $0x20] sm:$0xff]
        %v227 = vld [vmem:[%s181 + $0x28] sm:$0xff]
        %v228 = vld [vmem:[%s181 + $0x30] sm:$0xff]
        %v229 = vld [vmem:[%s181 + $0x38] sm:$0xff]
        %v230 = vld [vmem:[%s181 + $0x40] sm:$0xff]
        %v231 = vld [vmem:[%s181 + $0x48] sm:$0xff]
        %v232 = vld [vmem:[%s181 + $0x50] sm:$0xff]
        %v233 = vld [vmem:[%s181 + $0x58] sm:$0xff]
        %v234 = vld [vmem:[%s181 + $0x60] sm:$0xff]
        %v235 = vld [vmem:[%s181 + $0x68] sm:$0xff]
        %v236 = vld [vmem:[%s181 + $0x70] sm:$0xff]
        %v237 = vld [vmem:[%s181 + $0x78] sm:$0xff]
        %v238 = vld [vmem:[%s181 + $0x80] sm:$0xff]
        %v239 = vld [vmem:[%s181 + $0x88] sm:$0xff]
        %v240 = vld [vmem:[%s181 + $0x90] sm:$0xff]
        %v241 = vld [vmem:[%s181 + $0x98] sm:$0xff]
        %v242 = vld [vmem:[%s181 + $0xa0] sm:$0xff]
        %v243 = vld [vmem:[%s181 + $0xa8] sm:$0xff]
        %v244 = vld [vmem:[%s181 + $0xb0] sm:$0xff]
        %v245 = vld [vmem:[%s181 + $0xb8] sm:$0xff]
        %v246 = vld [vmem:[%s181 + $0xc0] sm:$0xff]
        %v247 = vld [vmem:[%s181 + $0xc8] sm:$0xff]
        %v248 = vld [vmem:[%s181 + $0xd0] sm:$0xff]
        %v249 = vld [vmem:[%s181 + $0xd8] sm:$0xff]
        %v250 = vld [vmem:[%s181 + $0xe0] sm:$0xff]
        %v251 = vld [vmem:[%s181 + $0xe8] sm:$0xff]
        %v252 = vld [vmem:[%s181 + $0xf0] sm:$0xff]
        %v253 = vld [vmem:[%s181 + $0xf8] sm:$0xff]
        %v254 = vpack.c.bf16 %v223, %v222
        %v255 = vpack.c.bf16 %v225, %v224
        %v256 = vpack.c.bf16 %v227, %v226
        %v257 = vpack.c.bf16 %v229, %v228
        %v258 = vpack.c.bf16 %v231, %v230
        %v259 = vpack.c.bf16 %v233, %v232
        %v260 = vpack.c.bf16 %v235, %v234
        %v261 = vpack.c.bf16 %v237, %v236
        %v262 = vpack.c.bf16 %v239, %v238
        %v263 = vpack.c.bf16 %v241, %v240
        %v264 = vpack.c.bf16 %v243, %v242
        %v265 = vpack.c.bf16 %v245, %v244
        %v266 = vpack.c.bf16 %v247, %v246
        %v267 = vpack.c.bf16 %v249, %v248
        %v268 = vpack.c.bf16 %v251, %v250
        %v269 = vpack.c.bf16 %v253, %v252
        %v270 = vld [vmem:[%s1] sm:$0xff]
        %v271 = vld [vmem:[%s1 + $0x8] sm:$0xff]
        %v272 = vld [vmem:[%s1 + $0x10] sm:$0xff]
        %v273 = vld [vmem:[%s1 + $0x18] sm:$0xff]
        %v274 = vld [vmem:[%s1 + $0x20] sm:$0xff]
        %v275 = vld [vmem:[%s1 + $0x28] sm:$0xff]
        %v276 = vld [vmem:[%s1 + $0x30] sm:$0xff]
        %v277 = vld [vmem:[%s1 + $0x38] sm:$0xff]
        %v278 = vld [vmem:[%s1 + $0x40] sm:$0xff]
        %v279 = vld [vmem:[%s1 + $0x48] sm:$0xff]
        %v280 = vld [vmem:[%s1 + $0x50] sm:$0xff]
        %v281 = vld [vmem:[%s1 + $0x58] sm:$0xff]
        %v282 = vld [vmem:[%s1 + $0x60] sm:$0xff]
        %v283 = vld [vmem:[%s1 + $0x68] sm:$0xff]
        %v284 = vld [vmem:[%s1 + $0x70] sm:$0xff]
        %v285 = vld [vmem:[%s1 + $0x78] sm:$0xff]
        %v286 = vld [vmem:[%s2] sm:$0x3]
        %v288 = vlaneseq
        %v289 = vshrl.u32 %v288, 7
        %v290 = vsub.s32 0, %v289
        %v291 = vrot.slane %v286, %v290
        %v292 = vlaneseq
        %v293 = vshrl.u32 %v292, 7
        %v294 = vsub.s32 1, %v293
        %v295 = vrot.slane %v286, %v294
        %v314 = vunpack.c.l.b16 %v270
        %v315 = vunpack.c.h.b16 %v270
        %v316 = vunpack.c.l.b16 %v271
        %v317 = vunpack.c.h.b16 %v271
        %v318 = vunpack.c.l.b16 %v272
        %v319 = vunpack.c.h.b16 %v272
        %v320 = vunpack.c.l.b16 %v273
        %v321 = vunpack.c.h.b16 %v273
        %v322 = vunpack.c.l.b16 %v274
        %v323 = vunpack.c.h.b16 %v274
        %v324 = vunpack.c.l.b16 %v275
        %v325 = vunpack.c.h.b16 %v275
        %v326 = vunpack.c.l.b16 %v276
        %v327 = vunpack.c.h.b16 %v276
        %v328 = vunpack.c.l.b16 %v277
        %v329 = vunpack.c.h.b16 %v277
        %v330 = vunpack.c.l.b16 %v278
        %v331 = vunpack.c.h.b16 %v278
        %v332 = vunpack.c.l.b16 %v279
        %v333 = vunpack.c.h.b16 %v279
        %v334 = vunpack.c.l.b16 %v280
        %v335 = vunpack.c.h.b16 %v280
        %v336 = vunpack.c.l.b16 %v281
        %v337 = vunpack.c.h.b16 %v281
        %v338 = vunpack.c.l.b16 %v282
        %v339 = vunpack.c.h.b16 %v282
        %v340 = vunpack.c.l.b16 %v283
        %v341 = vunpack.c.h.b16 %v283
        %v342 = vunpack.c.l.b16 %v284
        %v343 = vunpack.c.h.b16 %v284
        %v344 = vunpack.c.l.b16 %v285
        %v345 = vunpack.c.h.b16 %v285
        %v346 = vpack.c.b16 %v316, %v314
        %v347 = vpack.c.b16 %v317, %v315
        %v348 = vpack.c.b16 %v320, %v318
        %v349 = vpack.c.b16 %v321, %v319
        %v350 = vpack.c.b16 %v324, %v322
        %v351 = vpack.c.b16 %v325, %v323
        %v352 = vpack.c.b16 %v328, %v326
        %v353 = vpack.c.b16 %v329, %v327
        %v354 = vpack.c.b16 %v332, %v330
        %v355 = vpack.c.b16 %v333, %v331
        %v356 = vpack.c.b16 %v336, %v334
        %v357 = vpack.c.b16 %v337, %v335
        %v358 = vpack.c.b16 %v340, %v338
        %v359 = vpack.c.b16 %v341, %v339
        %v360 = vpack.c.b16 %v344, %v342
        %v361 = vpack.c.b16 %v345, %v343
        %378 = vmatprep.subr.bf16.mxu0 %v347
        %379 = vmatpush1.bf16.msra.mxu0 %v346
        %380 = vmatprep.subr.bf16.mxu0 %v349
        %381 = vmatpush1.bf16.msra.mxu0 %v348
        %382 = vmatprep.subr.bf16.mxu0 %v351
        %383 = vmatpush1.bf16.msra.mxu0 %v350
        %384 = vmatprep.subr.bf16.mxu0 %v353
        %385 = vmatpush1.bf16.msra.mxu0 %v352
        %386 = vmatprep.subr.bf16.mxu0 %v355
        %387 = vmatpush1.bf16.msra.mxu0 %v354
        %388 = vmatprep.subr.bf16.mxu0 %v357
        %389 = vmatpush1.bf16.msra.mxu0 %v356
        %390 = vmatprep.subr.bf16.mxu0 %v359
        %391 = vmatpush1.bf16.msra.mxu0 %v358
        %392 = vmatprep.subr.bf16.mxu0 %v361
        %393 = vmatpush1.bf16.msra.mxu0 %v360
        %394 = vmatprep.subr.bf16.mxu0 0
        %395 = vmatpush1.bf16.msra.mxu0 0
        %396 = vmatprep.subr.bf16.mxu0 0
        %397 = vmatpush1.bf16.msra.mxu0 0
        %398 = vmatprep.subr.bf16.mxu0 0
        %399 = vmatpush1.bf16.msra.mxu0 0
        %400 = vmatprep.subr.bf16.mxu0 0
        %401 = vmatpush1.bf16.msra.mxu0 0
        %402 = vmatprep.subr.bf16.mxu0 0
        %403 = vmatpush1.bf16.msra.mxu0 0
        %404 = vmatprep.subr.bf16.mxu0 0
        %405 = vmatpush1.bf16.msra.mxu0 0
        %406 = vmatprep.subr.bf16.mxu0 0
        %407 = vmatpush1.bf16.msra.mxu0 0
        %408 = vmatprep.subr.bf16.mxu0 0
        %409 = vmatpush1.bf16.msra.mxu0 0
        %410 = vmatprep.mubr.bf16.mxu0 0
        %411 = vmatmul.mubr.bf16.gmra.mrb[0].mxu0 %v254
        %v412 = vpop.f32.mrb[0].mxu0
        %v413 = vadd.f32 %v291, %v412
        %v414 = vpop.f32.mrb[0].mxu0
        %v415 = vadd.f32 %v295, %v414
        %v416 = vpop.f32.mrb[0].mxu0
        %v417 = vadd.f32 %v291, %v416
        %v418 = vpop.f32.mrb[0].mxu0
        %v419 = vadd.f32 %v295, %v418
        %420 = vmatprep.mubr.bf16.mxu0 0
        %421 = vmatmul.mubr.bf16.gmra.mrb[0].mxu0 %v255
        %v422 = vpop.f32.mrb[0].mxu0
        %v423 = vadd.f32 %v291, %v422
        %v424 = vpop.f32.mrb[0].mxu0
        %v425 = vadd.f32 %v295, %v424
        %v426 = vpop.f32.mrb[0].mxu0
        %v427 = vadd.f32 %v291, %v426
        %v428 = vpop.f32.mrb[0].mxu0
        %v429 = vadd.f32 %v295, %v428
        %430 = vmatprep.mubr.bf16.mxu0 0
        %431 = vmatmul.mubr.bf16.gmra.mrb[0].mxu0 %v256
        %v432 = vpop.f32.mrb[0].mxu0
        %v433 = vadd.f32 %v291, %v432
        %v434 = vpop.f32.mrb[0].mxu0
        %v435 = vadd.f32 %v295, %v434
        %v436 = vpop.f32.mrb[0].mxu0
        %v437 = vadd.f32 %v291, %v436
        %v438 = vpop.f32.mrb[0].mxu0
        %v439 = vadd.f32 %v295, %v438
        %440 = vmatprep.mubr.bf16.mxu0 0
        %441 = vmatmul.mubr.bf16.gmra.mrb[0].mxu0 %v257
        %v442 = vpop.f32.mrb[0].mxu0
        %v443 = vadd.f32 %v291, %v442
        %v444 = vpop.f32.mrb[0].mxu0
        %v445 = vadd.f32 %v295, %v444
        %v446 = vpop.f32.mrb[0].mxu0
        %v447 = vadd.f32 %v291, %v446
        %v448 = vpop.f32.mrb[0].mxu0
        %v449 = vadd.f32 %v295, %v448
        %450 = vmatprep.mubr.bf16.mxu0 0
        %451 = vmatmul.mubr.bf16.gmra.mrb[0].mxu0 %v258
        %v452 = vpop.f32.mrb[0].mxu0
        %v453 = vadd.f32 %v291, %v452
        %v454 = vpop.f32.mrb[0].mxu0
        %v455 = vadd.f32 %v295, %v454
        %v456 = vpop.f32.mrb[0].mxu0
        %v457 = vadd.f32 %v291, %v456
        %v458 = vpop.f32.mrb[0].mxu0
        %v459 = vadd.f32 %v295, %v458
        %460 = vmatprep.mubr.bf16.mxu0 0
        %461 = vmatmul.mubr.bf16.gmra.mrb[0].mxu0 %v259
        %v462 = vpop.f32.mrb[0].mxu0
        %v463 = vadd.f32 %v291, %v462
        %v464 = vpop.f32.mrb[0].mxu0
        %v465 = vadd.f32 %v295, %v464
        %v466 = vpop.f32.mrb[0].mxu0
        %v467 = vadd.f32 %v291, %v466
        %v468 = vpop.f32.mrb[0].mxu0
        %v469 = vadd.f32 %v295, %v468
        %470 = vmatprep.mubr.bf16.mxu0 0
        %471 = vmatmul.mubr.bf16.gmra.mrb[0].mxu0 %v260
        %v472 = vpop.f32.mrb[0].mxu0
        %v473 = vadd.f32 %v291, %v472
        %v474 = vpop.f32.mrb[0].mxu0
        %v475 = vadd.f32 %v295, %v474
        %v476 = vpop.f32.mrb[0].mxu0
        %v477 = vadd.f32 %v291, %v476
        %v478 = vpop.f32.mrb[0].mxu0
        %v479 = vadd.f32 %v295, %v478
        %480 = vmatprep.mubr.bf16.mxu0 0
        %481 = vmatmul.mubr.bf16.gmra.mrb[0].mxu0 %v261
        %v482 = vpop.f32.mrb[0].mxu0
        %v483 = vadd.f32 %v291, %v482
        %v484 = vpop.f32.mrb[0].mxu0
        %v485 = vadd.f32 %v295, %v484
        %v486 = vpop.f32.mrb[0].mxu0
        %v487 = vadd.f32 %v291, %v486
        %v488 = vpop.f32.mrb[0].mxu0
        %v489 = vadd.f32 %v295, %v488
        %490 = vmatprep.mubr.bf16.mxu0 0
        %491 = vmatmul.mubr.bf16.gmra.mrb[0].mxu0 %v262
        %v492 = vpop.f32.mrb[0].mxu0
        %v493 = vadd.f32 %v291, %v492
        %v494 = vpop.f32.mrb[0].mxu0
        %v495 = vadd.f32 %v295, %v494
        %v496 = vpop.f32.mrb[0].mxu0
        %v497 = vadd.f32 %v291, %v496
        %v498 = vpop.f32.mrb[0].mxu0
        %v499 = vadd.f32 %v295, %v498
        %500 = vmatprep.mubr.bf16.mxu0 0
        %501 = vmatmul.mubr.bf16.gmra.mrb[0].mxu0 %v263
        %v502 = vpop.f32.mrb[0].mxu0
        %v503 = vadd.f32 %v291, %v502
        %v504 = vpop.f32.mrb[0].mxu0
        %v505 = vadd.f32 %v295, %v504
        %v506 = vpop.f32.mrb[0].mxu0
        %v507 = vadd.f32 %v291, %v506
        %v508 = vpop.f32.mrb[0].mxu0
        %v509 = vadd.f32 %v295, %v508
        %510 = vmatprep.mubr.bf16.mxu0 0
        %511 = vmatmul.mubr.bf16.gmra.mrb[0].mxu0 %v264
        %v512 = vpop.f32.mrb[0].mxu0
        %v513 = vadd.f32 %v291, %v512
        %v514 = vpop.f32.mrb[0].mxu0
        %v515 = vadd.f32 %v295, %v514
        %v516 = vpop.f32.mrb[0].mxu0
        %v517 = vadd.f32 %v291, %v516
        %v518 = vpop.f32.mrb[0].mxu0
        %v519 = vadd.f32 %v295, %v518
        %520 = vmatprep.mubr.bf16.mxu0 0
        %521 = vmatmul.mubr.bf16.gmra.mrb[0].mxu0 %v265
        %v522 = vpop.f32.mrb[0].mxu0
        %v523 = vadd.f32 %v291, %v522
        %v524 = vpop.f32.mrb[0].mxu0
        %v525 = vadd.f32 %v295, %v524
        %v526 = vpop.f32.mrb[0].mxu0
        %v527 = vadd.f32 %v291, %v526
        %v528 = vpop.f32.mrb[0].mxu0
        %v529 = vadd.f32 %v295, %v528
        %530 = vmatprep.mubr.bf16.mxu0 0
        %531 = vmatmul.mubr.bf16.gmra.mrb[0].mxu0 %v266
        %v532 = vpop.f32.mrb[0].mxu0
        %v533 = vadd.f32 %v291, %v532
        %v534 = vpop.f32.mrb[0].mxu0
        %v535 = vadd.f32 %v295, %v534
        %v536 = vpop.f32.mrb[0].mxu0
        %v537 = vadd.f32 %v291, %v536
        %v538 = vpop.f32.mrb[0].mxu0
        %v539 = vadd.f32 %v295, %v538
        %540 = vmatprep.mubr.bf16.mxu0 0
        %541 = vmatmul.mubr.bf16.gmra.mrb[0].mxu0 %v267
        %v542 = vpop.f32.mrb[0].mxu0
        %v543 = vadd.f32 %v291, %v542
        %v544 = vpop.f32.mrb[0].mxu0
        %v545 = vadd.f32 %v295, %v544
        %v546 = vpop.f32.mrb[0].mxu0
        %v547 = vadd.f32 %v291, %v546
        %v548 = vpop.f32.mrb[0].mxu0
        %v549 = vadd.f32 %v295, %v548
        %550 = vmatprep.mubr.bf16.mxu0 0
        %551 = vmatmul.mubr.bf16.gmra.mrb[0].mxu0 %v268
        %v552 = vpop.f32.mrb[0].mxu0
        %v553 = vadd.f32 %v291, %v552
        %v554 = vpop.f32.mrb[0].mxu0
        %v555 = vadd.f32 %v295, %v554
        %v556 = vpop.f32.mrb[0].mxu0
        %v557 = vadd.f32 %v291, %v556
        %v558 = vpop.f32.mrb[0].mxu0
        %v559 = vadd.f32 %v295, %v558
        %560 = vmatprep.mubr.bf16.mxu0 0
        %561 = vmatmul.mubr.bf16.gmra.mrb[0].mxu0 %v269
        %v562 = vpop.f32.mrb[0].mxu0
        %v563 = vadd.f32 %v291, %v562
        %v564 = vpop.f32.mrb[0].mxu0
        %v565 = vadd.f32 %v295, %v564
        %v566 = vpop.f32.mrb[0].mxu0
        %v567 = vadd.f32 %v291, %v566
        %v568 = vpop.f32.mrb[0].mxu0
        %v569 = vadd.f32 %v295, %v568
        %570 = vdwg.mxu0
        %v571 = vpack.c.bf16 %v417, %v413
        %v572 = vpack.c.bf16 %v419, %v415
        %v573 = vpack.c.bf16 %v427, %v423
        %v574 = vpack.c.bf16 %v429, %v425
        %v575 = vpack.c.bf16 %v437, %v433
        %v576 = vpack.c.bf16 %v439, %v435
        %v577 = vpack.c.bf16 %v447, %v443
        %v578 = vpack.c.bf16 %v449, %v445
        %v579 = vpack.c.bf16 %v457, %v453
        %v580 = vpack.c.bf16 %v459, %v455
        %v581 = vpack.c.bf16 %v467, %v463
        %v582 = vpack.c.bf16 %v469, %v465
        %v583 = vpack.c.bf16 %v477, %v473
        %v584 = vpack.c.bf16 %v479, %v475
        %v585 = vpack.c.bf16 %v487, %v483
        %v586 = vpack.c.bf16 %v489, %v485
        %v587 = vpack.c.bf16 %v497, %v493
        %v588 = vpack.c.bf16 %v499, %v495
        %v589 = vpack.c.bf16 %v507, %v503
        %v590 = vpack.c.bf16 %v509, %v505
        %v591 = vpack.c.bf16 %v517, %v513
        %v592 = vpack.c.bf16 %v519, %v515
        %v593 = vpack.c.bf16 %v527, %v523
        %v594 = vpack.c.bf16 %v529, %v525
        %v595 = vpack.c.bf16 %v537, %v533
        %v596 = vpack.c.bf16 %v539, %v535
        %v597 = vpack.c.bf16 %v547, %v543
        %v598 = vpack.c.bf16 %v549, %v545
        %v599 = vpack.c.bf16 %v557, %v553
        %v600 = vpack.c.bf16 %v559, %v555
        %v601 = vpack.c.bf16 %v567, %v563
        %v602 = vpack.c.bf16 %v569, %v565
        %v635 = vunpack.c.l.b16 %v571
        %v636 = vunpack.c.l.b16 %v572
        %v637 = vunpack.c.h.b16 %v571
        %v638 = vunpack.c.h.b16 %v572
        %v639 = vunpack.c.l.b16 %v573
        %v640 = vunpack.c.l.b16 %v574
        %v641 = vunpack.c.h.b16 %v573
        %v642 = vunpack.c.h.b16 %v574
        %v643 = vunpack.c.l.b16 %v575
        %v644 = vunpack.c.l.b16 %v576
        %v645 = vunpack.c.h.b16 %v575
        %v646 = vunpack.c.h.b16 %v576
        %v647 = vunpack.c.l.b16 %v577
        %v648 = vunpack.c.l.b16 %v578
        %v649 = vunpack.c.h.b16 %v577
        %v650 = vunpack.c.h.b16 %v578
        %v651 = vunpack.c.l.b16 %v579
        %v652 = vunpack.c.l.b16 %v580
        %v653 = vunpack.c.h.b16 %v579
        %v654 = vunpack.c.h.b16 %v580
        %v655 = vunpack.c.l.b16 %v581
        %v656 = vunpack.c.l.b16 %v582
        %v657 = vunpack.c.h.b16 %v581
        %v658 = vunpack.c.h.b16 %v582
        %v659 = vunpack.c.l.b16 %v583
        %v660 = vunpack.c.l.b16 %v584
        %v661 = vunpack.c.h.b16 %v583
        %v662 = vunpack.c.h.b16 %v584
        %v663 = vunpack.c.l.b16 %v585
        %v664 = vunpack.c.l.b16 %v586
        %v665 = vunpack.c.h.b16 %v585
        %v666 = vunpack.c.h.b16 %v586
        %v667 = vunpack.c.l.b16 %v587
        %v668 = vunpack.c.l.b16 %v588
        %v669 = vunpack.c.h.b16 %v587
        %v670 = vunpack.c.h.b16 %v588
        %v671 = vunpack.c.l.b16 %v589
        %v672 = vunpack.c.l.b16 %v590
        %v673 = vunpack.c.h.b16 %v589
        %v674 = vunpack.c.h.b16 %v590
        %v675 = vunpack.c.l.b16 %v591
        %v676 = vunpack.c.l.b16 %v592
        %v677 = vunpack.c.h.b16 %v591
        %v678 = vunpack.c.h.b16 %v592
        %v679 = vunpack.c.l.b16 %v593
        %v680 = vunpack.c.l.b16 %v594
        %v681 = vunpack.c.h.b16 %v593
        %v682 = vunpack.c.h.b16 %v594
        %v683 = vunpack.c.l.b16 %v595
        %v684 = vunpack.c.l.b16 %v596
        %v685 = vunpack.c.h.b16 %v595
        %v686 = vunpack.c.h.b16 %v596
        %v687 = vunpack.c.l.b16 %v597
        %v688 = vunpack.c.l.b16 %v598
        %v689 = vunpack.c.h.b16 %v597
        %v690 = vunpack.c.h.b16 %v598
        %v691 = vunpack.c.l.b16 %v599
        %v692 = vunpack.c.l.b16 %v600
        %v693 = vunpack.c.h.b16 %v599
        %v694 = vunpack.c.h.b16 %v600
        %v695 = vunpack.c.l.b16 %v601
        %v696 = vunpack.c.l.b16 %v602
        %v697 = vunpack.c.h.b16 %v601
        %v698 = vunpack.c.h.b16 %v602
        %v699 = vpack.c.b16 %v636, %v635
        %v700 = vpack.c.b16 %v638, %v637
        %v701 = vpack.c.b16 %v640, %v639
        %v702 = vpack.c.b16 %v642, %v641
        %v703 = vpack.c.b16 %v644, %v643
        %v704 = vpack.c.b16 %v646, %v645
        %v705 = vpack.c.b16 %v648, %v647
        %v706 = vpack.c.b16 %v650, %v649
        %v707 = vpack.c.b16 %v652, %v651
        %v708 = vpack.c.b16 %v654, %v653
        %v709 = vpack.c.b16 %v656, %v655
        %v710 = vpack.c.b16 %v658, %v657
        %v711 = vpack.c.b16 %v660, %v659
        %v712 = vpack.c.b16 %v662, %v661
        %v713 = vpack.c.b16 %v664, %v663
        %v714 = vpack.c.b16 %v666, %v665
        %v715 = vpack.c.b16 %v668, %v667
        %v716 = vpack.c.b16 %v670, %v669
        %v717 = vpack.c.b16 %v672, %v671
        %v718 = vpack.c.b16 %v674, %v673
        %v719 = vpack.c.b16 %v676, %v675
        %v720 = vpack.c.b16 %v678, %v677
        %v721 = vpack.c.b16 %v680, %v679
        %v722 = vpack.c.b16 %v682, %v681
        %v723 = vpack.c.b16 %v684, %v683
        %v724 = vpack.c.b16 %v686, %v685
        %v725 = vpack.c.b16 %v688, %v687
        %v726 = vpack.c.b16 %v690, %v689
        %v727 = vpack.c.b16 %v692, %v691
        %v728 = vpack.c.b16 %v694, %v693
        %v729 = vpack.c.b16 %v696, %v695
        %v730 = vpack.c.b16 %v698, %v697
        %vm763 = vcmask 1043456
        %vm764 = vcmask 523268
        %vm765 = vmor %vm764, %vm763
        %766 = vst.msk [vmem:[%s219] sm:$0xff] %vm765, %v699
        %767 = vst.msk [vmem:[%s219 + $0x8] sm:$0xff] %vm765, %v700
        %768 = vst.msk [vmem:[%s219 + $0x10] sm:$0xff] %vm765, %v701
        %769 = vst.msk [vmem:[%s219 + $0x18] sm:$0xff] %vm765, %v702
        %770 = vst.msk [vmem:[%s219 + $0x20] sm:$0xff] %vm765, %v703
        %771 = vst.msk [vmem:[%s219 + $0x28] sm:$0xff] %vm765, %v704
        %772 = vst.msk [vmem:[%s219 + $0x30] sm:$0xff] %vm765, %v705
        %773 = vst.msk [vmem:[%s219 + $0x38] sm:$0xff] %vm765, %v706
        %774 = vst.msk [vmem:[%s219 + $0x40] sm:$0xff] %vm765, %v707
        %775 = vst.msk [vmem:[%s219 + $0x48] sm:$0xff] %vm765, %v708
        %776 = vst.msk [vmem:[%s219 + $0x50] sm:$0xff] %vm765, %v709
        %777 = vst.msk [vmem:[%s219 + $0x58] sm:$0xff] %vm765, %v710
        %778 = vst.msk [vmem:[%s219 + $0x60] sm:$0xff] %vm765, %v711
        %779 = vst.msk [vmem:[%s219 + $0x68] sm:$0xff] %vm765, %v712
        %780 = vst.msk [vmem:[%s219 + $0x70] sm:$0xff] %vm765, %v713
        %781 = vst.msk [vmem:[%s219 + $0x78] sm:$0xff] %vm765, %v714
        %782 = vst.msk [vmem:[%s219 + $0x80] sm:$0xff] %vm765, %v715
        %783 = vst.msk [vmem:[%s219 + $0x88] sm:$0xff] %vm765, %v716
        %784 = vst.msk [vmem:[%s219 + $0x90] sm:$0xff] %vm765, %v717
        %785 = vst.msk [vmem:[%s219 + $0x98] sm:$0xff] %vm765, %v718
        %786 = vst.msk [vmem:[%s219 + $0xa0] sm:$0xff] %vm765, %v719
        %787 = vst.msk [vmem:[%s219 + $0xa8] sm:$0xff] %vm765, %v720
        %788 = vst.msk [vmem:[%s219 + $0xb0] sm:$0xff] %vm765, %v721
        %789 = vst.msk [vmem:[%s219 + $0xb8] sm:$0xff] %vm765, %v722
        %790 = vst.msk [vmem:[%s219 + $0xc0] sm:$0xff] %vm765, %v723
        %791 = vst.msk [vmem:[%s219 + $0xc8] sm:$0xff] %vm765, %v724
        %792 = vst.msk [vmem:[%s219 + $0xd0] sm:$0xff] %vm765, %v725
        %793 = vst.msk [vmem:[%s219 + $0xd8] sm:$0xff] %vm765, %v726
        %794 = vst.msk [vmem:[%s219 + $0xe0] sm:$0xff] %vm765, %v727
        %795 = vst.msk [vmem:[%s219 + $0xe8] sm:$0xff] %vm765, %v728
        %796 = vst.msk [vmem:[%s219 + $0xf0] sm:$0xff] %vm765, %v729
        %797 = vst.msk [vmem:[%s219 + $0xf8] sm:$0xff] %vm765, %v730
        %s798 = smul.u32 32, %s22
        %p799 = scmp.lt.s32.totalorder %s21, 1
        %s800 = scalar_select %p799, %s21, 1
        %p801 = scmp.lt.s32.totalorder %s798, 31
        %s802 = scalar_select %p801, %s798, 31
        %s803 = smul.addr %s802, 2
        %s804 = smul.addr %s800, 64
        %s805 = sadd.s32 %s803, %s804
        %s806 = smul.addr %s805, 4
        %s807 = scalar_lea.vmem %s3, %s806
        // Predicated region
        $region37: #{tpu_custom_call.1} parent=31 // pred_check
          %p808 = pneg %p119
        $region38: #{tpu_custom_call.1} parent=31 // pred_check_branch
          %810 = sbr.rel (%p808) target = $region40
        $region39: #{tpu_custom_call.1} parent=31 // pred_region
          %s811 = smul.u32 32, %s22
        $region40: #{tpu_custom_call.1} parent=31 // pred_fallthru
          _
      $region32: #{tpu_custom_call.1} parent=5 // pred_fallthru
        _
      %p812 = scmp.le.s32.totalorder 2, %s12
      // Predicated region
      $region41: #{tpu_custom_call.1} parent=5 // pred_check
        %p813 = pneg %p812
      $region42: #{tpu_custom_call.1} parent=5 // pred_check_branch
        %815 = sbr.rel (%p813) target = $region44
      $region43: #{tpu_custom_call.1} parent=5 // pred_region
        %s816 = ssub.s32 %s12, 2
        // Predicated region
        $region45: #{tpu_custom_call.1} parent=43 // pred_check
          %p817 = pneg %p125
        $region46: #{tpu_custom_call.1} parent=43 // pred_check_branch
          %819 = sbr.rel (%p817) target = $region48
        $region47: #{tpu_custom_call.1} parent=43 // pred_region
          %s820 = smul.u32 32, %s24
          %p821 = scmp.lt.s32.totalorder %s23, 1
          %s822 = scalar_select %p821, %s23, 1
          %p823 = scmp.lt.s32.totalorder %s820, 31
          %s824 = scalar_select %p823, %s820, 31
          %s825 = smul.addr %s824, 2
          %s826 = smul.addr %s822, 64
          %s827 = sadd.s32 %s825, %s826
          %s828 = smul.addr %s827, 4
          %s829 = scalar_lea.vmem %s3, %s828
        $region48: #{tpu_custom_call.1} parent=43 // pred_fallthru
          _
      $region44: #{tpu_custom_call.1} parent=5 // pred_fallthru
        _
    $region6: #{tpu_custom_call.1} parent=1 // loop_footer
      %s16 = sadd.s32 1, %s12
    $region7: #{tpu_custom_call.1} parent=1 // loop_footer_branch
      %11 = sbr.rel target = $region3
    $region8: #{tpu_custom_call.1} parent=1 // loop_exit
      _
    %830 = vsyncpa [#allocation3], 1
    %s831 = scalar_lea.sflag [#allocation3], 1
    %832 = vsyncpa %s831, 1

</llo_original>
